<compile_context>
chip_gen: v7x
topology: tpu7x:2x2x1
jax: 0.10.0
libtpu: 0.0.40
codegen_flags: <defaults>
</compile_context>

<pallas_src>
import jax
import jax.numpy as jnp
from jax.experimental import pallas as pl
from jax.experimental.pallas import tpu as pltpu


# ---------------------------------------------------------------------------
# helpers
# ---------------------------------------------------------------------------
def _round_up(v, m):
    return ((v + m - 1) // m) * m


def _pad2(w, rows, cols):
    r, c = w.shape
    return jnp.pad(w, ((0, rows - r), (0, cols - c)))


def _vmem_capacity_bytes():
    """Physical VMEM of the local chip; conservative v7x fallback."""
    try:
        return int(pltpu.get_tpu_info().vmem_capacity_bytes)
    except Exception:
        return 64 * 1024 * 1024


def _pick_batch_block(B, N, F, Hp, budget_bytes, prefer_ge4_steps):
    """Largest divisor of B whose per-grid-step footprint fits the budget.

    Prefers an even grid-step count (and >=4 steps on 2-TC / small-VMEM
    chips) so the "parallel" batch axis splits evenly across TensorCores,
    as long as each step still moves enough bytes to amortize the ~0.35us
    per-step overhead.
    """
    per_graph = (2 * N * N * 2        # adj bf16, double-buffered
                 + 2 * N * F * 4      # x f32, double-buffered
                 + 2 * N * Hp * 4     # out f32, double-buffered
                 + 20 * N * Hp)       # in-kernel temporaries (proj/agg/pre/h)
    bt_cap = max(1, min(B, budget_bytes // per_graph))
    divisors = [d for d in range(1, B + 1) if B % d == 0 and d <= bt_cap]
    min_step_bytes = 1 << 20

    def score(d):
        steps = B // d
        big = (d * per_graph >= min_step_bytes
               or bt_cap * per_graph < min_step_bytes)
        even = steps % 2 == 0
        ge4 = even and steps >= 4
        return (prefer_ge4_steps and ge4 and big, even and big, d)

    return max(divisors, key=score)


# ---------------------------------------------------------------------------
# kernel
# ---------------------------------------------------------------------------
def gnn_kernel(x_ref, adj_ref, w0_ref, w12_ref, b_ref, o_ref):
    bf16 = jnp.bfloat16
    Bt, Nn, Fin = x_ref.shape
    Hp = o_ref.shape[-1]
    T = Bt * Nn                       # tokens (nodes) in this batch block

    adj = adj_ref[...]                # (Bt, N, N) bf16

    def aggregate(h16_3d):
        # per-graph neighbor sum: (Bt,N,N) @ (Bt,N,Hp), f32 accumulation.
        return jnp.einsum("bij,bjh->bih", adj, h16_3d,
                          preferred_element_type=jnp.float32)

    def mm(lhs16, rhs16):
        return jnp.dot(lhs16, rhs16, preferred_element_type=jnp.float32)

    # ---- layer 0: project first (lane-dense Hp), aggregate second ----
    x16 = x_ref[...].astype(bf16).reshape(T, Fin)
    x_rel = mm(x16, w0_ref[0])                     # (T, Hp) f32
    x_root = mm(x16, w0_ref[1])                    # (T, Hp) f32
    agg0 = aggregate(x_rel.astype(bf16).reshape(Bt, Nn, Hp))
    h16 = jnp.tanh(agg0.reshape(T, Hp) + x_root + b_ref[0]).astype(bf16)

    # ---- layers 1 & 2: two dots accumulated in f32 (no concat slab) ----
    def hidden_layer(h16_2d, wr16, wl16, b32):
        agg = aggregate(h16_2d.reshape(Bt, Nn, Hp)).reshape(T, Hp)
        pre = mm(agg.astype(bf16), wr16) + mm(h16_2d, wl16) + b32
        return jnp.tanh(pre)

    h1 = hidden_layer(h16, w12_ref[0], w12_ref[1], b_ref[1]).astype(bf16)
    h2 = hidden_layer(h1, w12_ref[2], w12_ref[3], b_ref[2])
    o_ref[...] = h2.reshape(Bt, Nn, Hp).astype(o_ref.dtype)


# ---------------------------------------------------------------------------
# wrapper
# ---------------------------------------------------------------------------
def gnn_forward(x, adj, params, weights=None, B=None, N=None):
    """Pallas implementation of GNN.forward(x, adj, weights, B, N).

    `weights`, `B`, `N` are accepted (and ignored) to mirror the PyTorch
    signature, which does not use them either.
    """
    Bx, Nx, F = x.shape
    H = params["w0_rel"].shape[1]
    Hp = _round_up(H, 128)            # lane-dense hidden/output dim
    Np = _round_up(Nx, 16)            # bf16 sublane alignment -> free reshapes

    # Pad along nodes with zero features and zero adjacency rows/cols:
    # padded nodes contribute nothing to real nodes and are sliced off.
    if Np != Nx:
        x = jnp.pad(x, ((0, 0), (0, Np - Nx), (0, 0)))
        adj = jnp.pad(adj, ((0, 0), (0, Np - Nx), (0, Np - Nx)))

    # layer-0 weights stacked: (2, F, Hp) -> [W0_rel, W0_root]
    w0 = jnp.stack([_pad2(params["w0_rel"], F, Hp),
                    _pad2(params["w0_root"], F, Hp)]).astype(jnp.bfloat16)

    # layers 1/2 weights stacked flat: (4, Hp, Hp) -> [W1_rel, W1_root, W2_rel, W2_root]
    w12 = jnp.stack([_pad2(params["w1_rel"], Hp, Hp),
                     _pad2(params["w1_root"], Hp, Hp),
                     _pad2(params["w2_rel"], Hp, Hp),
                     _pad2(params["w2_root"], Hp, Hp)]).astype(jnp.bfloat16)

    # biases stacked: (3, 1, Hp), kept in f32 (added to the f32 accumulator)
    bias = jnp.stack([_pad2(params["b0"], 1, Hp),
                      _pad2(params["b1"], 1, Hp),
                      _pad2(params["b2"], 1, Hp)]).astype(jnp.float32)

    # adjacency is 0/1 -> exact in bf16; halves the dominant HBM read stream.
    adj16 = adj.astype(jnp.bfloat16)
    x32 = x.astype(jnp.float32)

    # Generation-aware VMEM planning (v5e/v6e: 128 MiB, v7x: 64 MiB per TC).
    cap = _vmem_capacity_bytes()
    vmem_limit = int(min((cap * 3) // 4, cap - (8 << 20)))
    budget = int(min(cap // 2, max(cap - (40 << 20), (cap * 3) // 8)))
    fixed = w0.size * 2 + w12.size * 2 + bias.size * 4 + (2 << 20)
    prefer_ge4 = cap < (100 << 20)    # small-VMEM chips (v7x) have 2 TCs
    Bt = _pick_batch_block(Bx, Np, F, Hp, budget - fixed, prefer_ge4)
    grid = (Bx // Bt,)

    def build_specs(single_buffer_weights):
        def const_spec(shape, imap):
            if single_buffer_weights:
                # grid-constant inputs: skip double-buffering -> saves VMEM
                return pl.BlockSpec(shape, imap, pipeline_mode=pl.Buffered(1))
            return pl.BlockSpec(shape, imap)

        in_specs = [
            pl.BlockSpec((Bt, Np, F), lambda b: (b, 0, 0)),      # x
            pl.BlockSpec((Bt, Np, Np), lambda b: (b, 0, 0)),     # adj (bf16)
            const_spec((2, F, Hp), lambda b: (0, 0, 0)),         # layer-0 W
            const_spec((4, Hp, Hp), lambda b: (0, 0, 0)),        # layer-1/2 W
            const_spec((3, 1, Hp), lambda b: (0, 0, 0)),         # biases
        ]
        out_spec = pl.BlockSpec((Bt, Np, Hp), lambda b: (b, 0, 0))
        return in_specs, out_spec

    def run(single_buffer_weights):
        in_specs, out_spec = build_specs(single_buffer_weights)
        return pl.pallas_call(
            gnn_kernel,
            out_shape=jax.ShapeDtypeStruct((Bx, Np, Hp), jnp.float32),
            grid=grid,
            in_specs=in_specs,
            out_specs=out_spec,
            compiler_params=pltpu.CompilerParams(
                dimension_semantics=("parallel",),
                vmem_limit_bytes=vmem_limit),
        )(x32, adj16, w0, w12, bias)

    try:
        out_padded = run(True)
    except Exception:
        # pl.Buffered(1) is a pure VMEM saving on grid-constant inputs; fall
        # back to default double-buffering if this jax/Mosaic rejects it.
        out_padded = run(False)

    if Np != Nx or Hp != H:
        return out_padded[:, :Nx, :H]     # drop zero node/feature padding
    return out_padded


# ---------------------------------------------------------------------------
# references (for correctness checks)
# ---------------------------------------------------------------------------
def gnn_reference(x, adj, params):
    """Pure-f32 JAX reference of the same forward pass."""
    def layer(h, wr, wl, b):
        agg = jnp.einsum("bij,bjf->bif", adj, h)
        return jnp.tanh(agg @ wr + b + h @ wl)
    h = layer(x, params["w0_rel"], params["w0_root"], params["b0"])
    h = layer(h, params["w1_rel"], params["w1_root"], params["b1"])
    return layer(h, params["w2_rel"], params["w2_root"], params["b2"])


def gnn_reference_bf16(x, adj, params):
    """Reference with the same bf16-operand / f32-accumulate structure
    (project-first layer 0, two-dot hidden layers) as the kernel."""
    bf16 = jnp.bfloat16
    adj16 = adj.astype(bf16)

    def agg32(h16):
        return jnp.einsum("bij,bjh->bih", adj16, h16,
                          preferred_element_type=jnp.float32)

    def proj32(a, w):
        return jnp.einsum("bnf,fh->bnh", a.astype(bf16), w.astype(bf16),
                          preferred_element_type=jnp.float32)

    # layer 0: project first, aggregate second
    x_rel = proj32(x, params["w0_rel"])
    x_root = proj32(x, params["w0_root"])
    h = jnp.tanh(agg32(x_rel.astype(bf16)) + x_root + params["b0"])

    def hidden(h, wr, wl, b):
        h16 = h.astype(bf16)
        agg = agg32(h16)
        pre = proj32(agg, wr) + proj32(h16, wl) + b
        return jnp.tanh(pre)

    h = hidden(h, params["w1_rel"], params["w1_root"], params["b1"])
    return hidden(h, params["w2_rel"], params["w2_root"], params["b2"])


def init_params(key, obs_size, hidden_size):
    """Deterministic synthetic parameters, stored as [in_features, out_features]."""
    keys = jax.random.split(key, 9)

    def w(k, fan_in, fan_out):
        scale = 1.0 / jnp.sqrt(jnp.float32(fan_in))
        return jax.random.uniform(k, (fan_in, fan_out), jnp.float32,
                                  -scale, scale)

    return {
        "w0_rel":  w(keys[0], obs_size, hidden_size),
        "w0_root": w(keys[1], obs_size, hidden_size),
        "b0":      w(keys[2], 1, hidden_size),
        "w1_rel":  w(keys[3], hidden_size, hidden_size),
        "w1_root": w(keys[4], hidden_size, hidden_size),
        "b1":      w(keys[5], 1, hidden_size),
        "w2_rel":  w(keys[6], hidden_size, hidden_size),
        "w2_root": w(keys[7], hidden_size, hidden_size),
        "b2":      w(keys[8], 1, hidden_size),
    }


if __name__ == "__main__":
    obs_size = 2
    hidden_size = 32   # small test size (module default is 256)
    B, N = 2, 8

    key = jax.random.PRNGKey(0)
    kx, kadj, kp = jax.random.split(key, 3)

    x = jax.random.normal(kx, (B, N, obs_size), jnp.float32)
    # symmetric 0/1 adjacency with self-loops removed
    a = (jax.random.uniform(kadj, (B, N, N)) > 0.5).astype(jnp.float32)
    adj = jnp.clip(a + jnp.swapaxes(a, 1, 2), 0.0, 1.0)
    adj = adj * (1.0 - jnp.eye(N, dtype=jnp.float32)[None])

    params = init_params(kp, obs_size, hidden_size)

    out = gnn_forward(x, adj, params, weights=None, B=B, N=N)
    out = jax.block_until_ready(out)

    ref_bf16 = gnn_reference_bf16(x, adj, params)   # matched-precision ref
    ref_f32 = gnn_reference(x, adj, params)         # full-precision sanity ref

    assert out.shape == (B, N, hidden_size)
    assert jnp.allclose(out, ref_bf16, atol=2e-3, rtol=2e-3)
    assert jnp.allclose(out, ref_f32, atol=2e-1, rtol=1e-1)

    print("KERNEL_OK")
</pallas_src>

<mosaic_0001>
module attributes {stable_mosaic.version = 11 : i64} {
  func.func @gnn_kernel(%arg0: i32, %arg1: memref<1x16x2xf32, #tpu.memory_space<vmem>>, %arg2: memref<1x16x16xbf16, #tpu.memory_space<vmem>>, %arg3: memref<2x2x128xbf16, #tpu.memory_space<vmem>>, %arg4: memref<4x128x128xbf16, #tpu.memory_space<vmem>>, %arg5: memref<3x1x128xf32, #tpu.memory_space<vmem>>, %arg6: memref<1x16x128xf32, #tpu.memory_space<vmem>>) attributes {dimension_semantics = [#tpu.dimension_semantics<parallel>], iteration_bounds = array<i64: 2>, scalar_prefetch = 0 : i64, scratch_operands = 0 : i64, tpu.core_type = #tpu.core_type<tc>, window_params = [{transform_indices = @transform_0, window_bounds = array<i64: 1, 16, 2>}, {transform_indices = @transform_1, window_bounds = array<i64: 1, 16, 16>}, {pipeline_mode = #tpu.pipeline_mode<synchronous>, transform_indices = @transform_2, window_bounds = array<i64: 2, 2, 128>}, {pipeline_mode = #tpu.pipeline_mode<synchronous>, transform_indices = @transform_3, window_bounds = array<i64: 4, 128, 128>}, {pipeline_mode = #tpu.pipeline_mode<synchronous>, transform_indices = @transform_4, window_bounds = array<i64: 3, 1, 128>}, {transform_indices = @transform_5, window_bounds = array<i64: 1, 16, 128>}]} {
    %c0 = arith.constant 0 : index
    %c0_0 = arith.constant 0 : index
    %c0_1 = arith.constant 0 : index
    %0 = vector.load %arg2[%c0, %c0_0, %c0_1] : memref<1x16x16xbf16, #tpu.memory_space<vmem>>, vector<1x16x16xbf16>
    %c0_2 = arith.constant 0 : index
    %c0_3 = arith.constant 0 : index
    %c0_4 = arith.constant 0 : index
    %1 = vector.load %arg1[%c0_2, %c0_3, %c0_4] : memref<1x16x2xf32, #tpu.memory_space<vmem>>, vector<1x16x2xf32>
    %2 = arith.truncf %1 : vector<1x16x2xf32> to vector<1x16x2xbf16>
    %3 = vector.shape_cast %2 : vector<1x16x2xbf16> to vector<16x2xbf16>
    %c0_5 = arith.constant 0 : index
    %c0_6 = arith.constant 0 : index
    %c0_7 = arith.constant 0 : index
    %4 = vector.load %arg3[%c0_5, %c0_6, %c0_7] : memref<2x2x128xbf16, #tpu.memory_space<vmem>>, vector<1x2x128xbf16>
    %5 = vector.shape_cast %4 : vector<1x2x128xbf16> to vector<2x128xbf16>
    %cst = arith.constant dense<0.000000e+00> : vector<16x128xf32>
    %6 = tpu.matmul %3, %5, %cst {dimension_numbers = #tpu.dot_dimension_numbers<[1], [0], [0], [1], [0, 0, 1, 1], [], []>} : vector<16x2xbf16>, vector<2x128xbf16>, vector<16x128xf32> -> vector<16x128xf32>
    %c1 = arith.constant 1 : index
    %c0_8 = arith.constant 0 : index
    %c0_9 = arith.constant 0 : index
    %7 = vector.load %arg3[%c1, %c0_8, %c0_9] : memref<2x2x128xbf16, #tpu.memory_space<vmem>>, vector<1x2x128xbf16>
    %8 = vector.shape_cast %7 : vector<1x2x128xbf16> to vector<2x128xbf16>
    %cst_10 = arith.constant dense<0.000000e+00> : vector<16x128xf32>
    %9 = tpu.matmul %3, %8, %cst_10 {dimension_numbers = #tpu.dot_dimension_numbers<[1], [0], [0], [1], [0, 0, 1, 1], [], []>} : vector<16x2xbf16>, vector<2x128xbf16>, vector<16x128xf32> -> vector<16x128xf32>
    %10 = arith.truncf %6 : vector<16x128xf32> to vector<16x128xbf16>
    %11 = vector.shape_cast %10 : vector<16x128xbf16> to vector<1x16x128xbf16>
    "tpu.trace_start"() <{level = 10 : i32, message = "bij,bjh->bih"}> : () -> ()
    %cst_11 = arith.constant dense<0.000000e+00> : vector<1x16x128xf32>
    %12 = tpu.matmul %0, %11, %cst_11 {dimension_numbers = #tpu.dot_dimension_numbers<[2], [1], [1], [2], [0, 0, 0, 1, 1, 2], [0], [0]>} : vector<1x16x16xbf16>, vector<1x16x128xbf16>, vector<1x16x128xf32> -> vector<1x16x128xf32>
    "tpu.trace_stop"() : () -> ()
    %13 = vector.shape_cast %12 : vector<1x16x128xf32> to vector<16x128xf32>
    %14 = arith.addf %13, %9 : vector<16x128xf32>
    %c0_12 = arith.constant 0 : index
    %c0_13 = arith.constant 0 : index
    %c0_14 = arith.constant 0 : index
    %15 = vector.load %arg5[%c0_12, %c0_13, %c0_14] : memref<3x1x128xf32, #tpu.memory_space<vmem>>, vector<1x1x128xf32>
    %16 = vector.shape_cast %15 : vector<1x1x128xf32> to vector<1x128xf32>
    %17 = vector.broadcast %16 : vector<1x128xf32> to vector<16x128xf32>
    %18 = arith.addf %14, %17 : vector<16x128xf32>
    %19 = math.tanh %18 : vector<16x128xf32>
    %20 = arith.truncf %19 : vector<16x128xf32> to vector<16x128xbf16>
    %c0_15 = arith.constant 0 : index
    %c0_16 = arith.constant 0 : index
    %c0_17 = arith.constant 0 : index
    %21 = vector.load %arg4[%c0_15, %c0_16, %c0_17] : memref<4x128x128xbf16, #tpu.memory_space<vmem>>, vector<1x128x128xbf16>
    %22 = vector.shape_cast %21 : vector<1x128x128xbf16> to vector<128x128xbf16>
    %c1_18 = arith.constant 1 : index
    %c0_19 = arith.constant 0 : index
    %c0_20 = arith.constant 0 : index
    %23 = vector.load %arg4[%c1_18, %c0_19, %c0_20] : memref<4x128x128xbf16, #tpu.memory_space<vmem>>, vector<1x128x128xbf16>
    %24 = vector.shape_cast %23 : vector<1x128x128xbf16> to vector<128x128xbf16>
    %c1_21 = arith.constant 1 : index
    %c0_22 = arith.constant 0 : index
    %c0_23 = arith.constant 0 : index
    %25 = vector.load %arg5[%c1_21, %c0_22, %c0_23] : memref<3x1x128xf32, #tpu.memory_space<vmem>>, vector<1x1x128xf32>
    %26 = vector.shape_cast %25 : vector<1x1x128xf32> to vector<1x128xf32>
    %27 = vector.shape_cast %20 : vector<16x128xbf16> to vector<1x16x128xbf16>
    "tpu.trace_start"() <{level = 10 : i32, message = "bij,bjh->bih"}> : () -> ()
    %cst_24 = arith.constant dense<0.000000e+00> : vector<1x16x128xf32>
    %28 = tpu.matmul %0, %27, %cst_24 {dimension_numbers = #tpu.dot_dimension_numbers<[2], [1], [1], [2], [0, 0, 0, 1, 1, 2], [0], [0]>} : vector<1x16x16xbf16>, vector<1x16x128xbf16>, vector<1x16x128xf32> -> vector<1x16x128xf32>
    "tpu.trace_stop"() : () -> ()
    %29 = vector.shape_cast %28 : vector<1x16x128xf32> to vector<16x128xf32>
    %30 = arith.truncf %29 : vector<16x128xf32> to vector<16x128xbf16>
    %cst_25 = arith.constant dense<0.000000e+00> : vector<16x128xf32>
    %31 = tpu.matmul %30, %22, %cst_25 {dimension_numbers = #tpu.dot_dimension_numbers<[1], [0], [0], [1], [0, 0, 1, 1], [], []>} : vector<16x128xbf16>, vector<128x128xbf16>, vector<16x128xf32> -> vector<16x128xf32>
    %cst_26 = arith.constant dense<0.000000e+00> : vector<16x128xf32>
    %32 = tpu.matmul %20, %24, %cst_26 {dimension_numbers = #tpu.dot_dimension_numbers<[1], [0], [0], [1], [0, 0, 1, 1], [], []>} : vector<16x128xbf16>, vector<128x128xbf16>, vector<16x128xf32> -> vector<16x128xf32>
    %33 = arith.addf %31, %32 : vector<16x128xf32>
    %34 = vector.broadcast %26 : vector<1x128xf32> to vector<16x128xf32>
    %35 = arith.addf %33, %34 : vector<16x128xf32>
    %36 = math.tanh %35 : vector<16x128xf32>
    %37 = arith.truncf %36 : vector<16x128xf32> to vector<16x128xbf16>
    %c2 = arith.constant 2 : index
    %c0_27 = arith.constant 0 : index
    %c0_28 = arith.constant 0 : index
    %38 = vector.load %arg4[%c2, %c0_27, %c0_28] : memref<4x128x128xbf16, #tpu.memory_space<vmem>>, vector<1x128x128xbf16>
    %39 = vector.shape_cast %38 : vector<1x128x128xbf16> to vector<128x128xbf16>
    %c3 = arith.constant 3 : index
    %c0_29 = arith.constant 0 : index
    %c0_30 = arith.constant 0 : index
    %40 = vector.load %arg4[%c3, %c0_29, %c0_30] : memref<4x128x128xbf16, #tpu.memory_space<vmem>>, vector<1x128x128xbf16>
    %41 = vector.shape_cast %40 : vector<1x128x128xbf16> to vector<128x128xbf16>
    %c2_31 = arith.constant 2 : index
    %c0_32 = arith.constant 0 : index
    %c0_33 = arith.constant 0 : index
    %42 = vector.load %arg5[%c2_31, %c0_32, %c0_33] : memref<3x1x128xf32, #tpu.memory_space<vmem>>, vector<1x1x128xf32>
    %43 = vector.shape_cast %42 : vector<1x1x128xf32> to vector<1x128xf32>
    %44 = vector.shape_cast %37 : vector<16x128xbf16> to vector<1x16x128xbf16>
    "tpu.trace_start"() <{level = 10 : i32, message = "bij,bjh->bih"}> : () -> ()
    %cst_34 = arith.constant dense<0.000000e+00> : vector<1x16x128xf32>
    %45 = tpu.matmul %0, %44, %cst_34 {dimension_numbers = #tpu.dot_dimension_numbers<[2], [1], [1], [2], [0, 0, 0, 1, 1, 2], [0], [0]>} : vector<1x16x16xbf16>, vector<1x16x128xbf16>, vector<1x16x128xf32> -> vector<1x16x128xf32>
    "tpu.trace_stop"() : () -> ()
    %46 = vector.shape_cast %45 : vector<1x16x128xf32> to vector<16x128xf32>
    %47 = arith.truncf %46 : vector<16x128xf32> to vector<16x128xbf16>
    %cst_35 = arith.constant dense<0.000000e+00> : vector<16x128xf32>
    %48 = tpu.matmul %47, %39, %cst_35 {dimension_numbers = #tpu.dot_dimension_numbers<[1], [0], [0], [1], [0, 0, 1, 1], [], []>} : vector<16x128xbf16>, vector<128x128xbf16>, vector<16x128xf32> -> vector<16x128xf32>
    %cst_36 = arith.constant dense<0.000000e+00> : vector<16x128xf32>
    %49 = tpu.matmul %37, %41, %cst_36 {dimension_numbers = #tpu.dot_dimension_numbers<[1], [0], [0], [1], [0, 0, 1, 1], [], []>} : vector<16x128xbf16>, vector<128x128xbf16>, vector<16x128xf32> -> vector<16x128xf32>
    %50 = arith.addf %48, %49 : vector<16x128xf32>
    %51 = vector.broadcast %43 : vector<1x128xf32> to vector<16x128xf32>
    %52 = arith.addf %50, %51 : vector<16x128xf32>
    %53 = math.tanh %52 : vector<16x128xf32>
    %54 = vector.shape_cast %53 : vector<16x128xf32> to vector<1x16x128xf32>
    %c0_37 = arith.constant 0 : index
    %c0_38 = arith.constant 0 : index
    %c0_39 = arith.constant 0 : index
    %55 = vector.load %arg6[%c0_37, %c0_38, %c0_39] : memref<1x16x128xf32, #tpu.memory_space<vmem>>, vector<1x16x128xf32>
    tpu.vector_store %arg6[%c0_37, %c0_38, %c0_39], %54 {strides = array<i32>} : memref<1x16x128xf32, #tpu.memory_space<vmem>>, vector<1x16x128xf32>,
    return
  }
  func.func @transform_0(%arg0: i32) -> (i32, i32, i32) {
    %c0_i32 = arith.constant 0 : i32
    %c0_i32_0 = arith.constant 0 : i32
    %c0_i32_1 = arith.constant 0 : i32
    return %arg0, %c0_i32, %c0_i32_0 : i32, i32, i32
  }
  func.func @transform_1(%arg0: i32) -> (i32, i32, i32) {
    %c0_i32 = arith.constant 0 : i32
    %c0_i32_0 = arith.constant 0 : i32
    %c0_i32_1 = arith.constant 0 : i32
    return %arg0, %c0_i32, %c0_i32_0 : i32, i32, i32
  }
  func.func @transform_2(%arg0: i32) -> (i32, i32, i32) {
    %c0_i32 = arith.constant 0 : i32
    %c0_i32_0 = arith.constant 0 : i32
    %c0_i32_1 = arith.constant 0 : i32
    %c0_i32_2 = arith.constant 0 : i32
    return %c0_i32, %c0_i32_0, %c0_i32_1 : i32, i32, i32
  }
  func.func @transform_3(%arg0: i32) -> (i32, i32, i32) {
    %c0_i32 = arith.constant 0 : i32
    %c0_i32_0 = arith.constant 0 : i32
    %c0_i32_1 = arith.constant 0 : i32
    %c0_i32_2 = arith.constant 0 : i32
    return %c0_i32, %c0_i32_0, %c0_i32_1 : i32, i32, i32
  }
  func.func @transform_4(%arg0: i32) -> (i32, i32, i32) {
    %c0_i32 = arith.constant 0 : i32
    %c0_i32_0 = arith.constant 0 : i32
    %c0_i32_1 = arith.constant 0 : i32
    %c0_i32_2 = arith.constant 0 : i32
    return %c0_i32, %c0_i32_0, %c0_i32_1 : i32, i32, i32
  }
  func.func @transform_5(%arg0: i32) -> (i32, i32, i32) {
    %c0_i32 = arith.constant 0 : i32
    %c0_i32_0 = arith.constant 0 : i32
    %c0_i32_1 = arith.constant 0 : i32
    return %arg0, %c0_i32, %c0_i32_0 : i32, i32, i32
  }
}

module attributes {stable_mosaic.version = 11 : i64} {
  func.func @gnn_kernel(%arg0: i32, %arg1: memref<1x16x2xf32, #tpu.memory_space<vmem>>, %arg2: memref<1x16x16xbf16, #tpu.memory_space<vmem>>, %arg3: memref<2x2x128xbf16, #tpu.memory_space<vmem>>, %arg4: memref<4x128x128xbf16, #tpu.memory_space<vmem>>, %arg5: memref<3x1x128xf32, #tpu.memory_space<vmem>>, %arg6: memref<1x16x128xf32, #tpu.memory_space<vmem>>) attributes {dimension_semantics = [#tpu.dimension_semantics<parallel>], iteration_bounds = array<i64: 2>, scalar_prefetch = 0 : i64, scratch_operands = 0 : i64, tpu.core_type = #tpu.core_type<tc>, window_params = [{transform_indices = @transform_0, window_bounds = array<i64: 1, 16, 2>}, {transform_indices = @transform_1, window_bounds = array<i64: 1, 16, 16>}, {pipeline_mode = #tpu.pipeline_mode<synchronous>, transform_indices = @transform_2, window_bounds = array<i64: 2, 2, 128>}, {pipeline_mode = #tpu.pipeline_mode<synchronous>, transform_indices = @transform_3, window_bounds = array<i64: 4, 128, 128>}, {pipeline_mode = #tpu.pipeline_mode<synchronous>, transform_indices = @transform_4, window_bounds = array<i64: 3, 1, 128>}, {transform_indices = @transform_5, window_bounds = array<i64: 1, 16, 128>}]} {
    %c0 = arith.constant 0 : index
    %c0_0 = arith.constant 0 : index
    %c0_1 = arith.constant 0 : index
    %0 = vector.load %arg2[%c0, %c0_0, %c0_1] : memref<1x16x16xbf16, #tpu.memory_space<vmem>>, vector<1x16x16xbf16>
    %c0_2 = arith.constant 0 : index
    %c0_3 = arith.constant 0 : index
    %c0_4 = arith.constant 0 : index
    %1 = vector.load %arg1[%c0_2, %c0_3, %c0_4] : memref<1x16x2xf32, #tpu.memory_space<vmem>>, vector<1x16x2xf32>
    %2 = arith.truncf %1 : vector<1x16x2xf32> to vector<1x16x2xbf16>
    %3 = vector.shape_cast %2 : vector<1x16x2xbf16> to vector<16x2xbf16>
    %c0_5 = arith.constant 0 : index
    %c0_6 = arith.constant 0 : index
    %c0_7 = arith.constant 0 : index
    %4 = vector.load %arg3[%c0_5, %c0_6, %c0_7] : memref<2x2x128xbf16, #tpu.memory_space<vmem>>, vector<1x2x128xbf16>
    %5 = vector.shape_cast %4 : vector<1x2x128xbf16> to vector<2x128xbf16>
    %cst = arith.constant dense<0.000000e+00> : vector<16x128xf32>
    %6 = tpu.matmul %3, %5, %cst {dimension_numbers = #tpu.dot_dimension_numbers<[1], [0], [0], [1], [0, 0, 1, 1], [], []>} : vector<16x2xbf16>, vector<2x128xbf16>, vector<16x128xf32> -> vector<16x128xf32>
    %c1 = arith.constant 1 : index
    %c0_8 = arith.constant 0 : index
    %c0_9 = arith.constant 0 : index
    %7 = vector.load %arg3[%c1, %c0_8, %c0_9] : memref<2x2x128xbf16, #tpu.memory_space<vmem>>, vector<1x2x128xbf16>
    %8 = vector.shape_cast %7 : vector<1x2x128xbf16> to vector<2x128xbf16>
    %cst_10 = arith.constant dense<0.000000e+00> : vector<16x128xf32>
    %9 = tpu.matmul %3, %8, %cst_10 {dimension_numbers = #tpu.dot_dimension_numbers<[1], [0], [0], [1], [0, 0, 1, 1], [], []>} : vector<16x2xbf16>, vector<2x128xbf16>, vector<16x128xf32> -> vector<16x128xf32>
    %10 = arith.truncf %6 : vector<16x128xf32> to vector<16x128xbf16>
    %11 = vector.shape_cast %10 : vector<16x128xbf16> to vector<1x16x128xbf16>
    "tpu.trace_start"() <{level = 10 : i32, message = "bij,bjh->bih"}> : () -> ()
    %cst_11 = arith.constant dense<0.000000e+00> : vector<1x16x128xf32>
    %12 = tpu.matmul %0, %11, %cst_11 {dimension_numbers = #tpu.dot_dimension_numbers<[2], [1], [1], [2], [0, 0, 0, 1, 1, 2], [0], [0]>} : vector<1x16x16xbf16>, vector<1x16x128xbf16>, vector<1x16x128xf32> -> vector<1x16x128xf32>
    "tpu.trace_stop"() : () -> ()
    %13 = vector.shape_cast %12 : vector<1x16x128xf32> to vector<16x128xf32>
    %14 = arith.addf %13, %9 : vector<16x128xf32>
    %c0_12 = arith.constant 0 : index
    %c0_13 = arith.constant 0 : index
    %c0_14 = arith.constant 0 : index
    %15 = vector.load %arg5[%c0_12, %c0_13, %c0_14] : memref<3x1x128xf32, #tpu.memory_space<vmem>>, vector<1x1x128xf32>
    %16 = vector.shape_cast %15 : vector<1x1x128xf32> to vector<1x128xf32>
    %17 = vector.broadcast %16 : vector<1x128xf32> to vector<16x128xf32>
    %18 = arith.addf %14, %17 : vector<16x128xf32>
    %19 = math.tanh %18 : vector<16x128xf32>
    %20 = arith.truncf %19 : vector<16x128xf32> to vector<16x128xbf16>
    %c0_15 = arith.constant 0 : index
    %c0_16 = arith.constant 0 : index
    %c0_17 = arith.constant 0 : index
    %21 = vector.load %arg4[%c0_15, %c0_16, %c0_17] : memref<4x128x128xbf16, #tpu.memory_space<vmem>>, vector<1x128x128xbf16>
    %22 = vector.shape_cast %21 : vector<1x128x128xbf16> to vector<128x128xbf16>
    %c1_18 = arith.constant 1 : index
    %c0_19 = arith.constant 0 : index
    %c0_20 = arith.constant 0 : index
    %23 = vector.load %arg4[%c1_18, %c0_19, %c0_20] : memref<4x128x128xbf16, #tpu.memory_space<vmem>>, vector<1x128x128xbf16>
    %24 = vector.shape_cast %23 : vector<1x128x128xbf16> to vector<128x128xbf16>
    %c1_21 = arith.constant 1 : index
    %c0_22 = arith.constant 0 : index
    %c0_23 = arith.constant 0 : index
    %25 = vector.load %arg5[%c1_21, %c0_22, %c0_23] : memref<3x1x128xf32, #tpu.memory_space<vmem>>, vector<1x1x128xf32>
    %26 = vector.shape_cast %25 : vector<1x1x128xf32> to vector<1x128xf32>
    %27 = vector.shape_cast %20 : vector<16x128xbf16> to vector<1x16x128xbf16>
    "tpu.trace_start"() <{level = 10 : i32, message = "bij,bjh->bih"}> : () -> ()
    %cst_24 = arith.constant dense<0.000000e+00> : vector<1x16x128xf32>
    %28 = tpu.matmul %0, %27, %cst_24 {dimension_numbers = #tpu.dot_dimension_numbers<[2], [1], [1], [2], [0, 0, 0, 1, 1, 2], [0], [0]>} : vector<1x16x16xbf16>, vector<1x16x128xbf16>, vector<1x16x128xf32> -> vector<1x16x128xf32>
    "tpu.trace_stop"() : () -> ()
    %29 = vector.shape_cast %28 : vector<1x16x128xf32> to vector<16x128xf32>
    %30 = arith.truncf %29 : vector<16x128xf32> to vector<16x128xbf16>
    %cst_25 = arith.constant dense<0.000000e+00> : vector<16x128xf32>
    %31 = tpu.matmul %30, %22, %cst_25 {dimension_numbers = #tpu.dot_dimension_numbers<[1], [0], [0], [1], [0, 0, 1, 1], [], []>} : vector<16x128xbf16>, vector<128x128xbf16>, vector<16x128xf32> -> vector<16x128xf32>
    %cst_26 = arith.constant dense<0.000000e+00> : vector<16x128xf32>
    %32 = tpu.matmul %20, %24, %cst_26 {dimension_numbers = #tpu.dot_dimension_numbers<[1], [0], [0], [1], [0, 0, 1, 1], [], []>} : vector<16x128xbf16>, vector<128x128xbf16>, vector<16x128xf32> -> vector<16x128xf32>
    %33 = arith.addf %31, %32 : vector<16x128xf32>
    %34 = vector.broadcast %26 : vector<1x128xf32> to vector<16x128xf32>
    %35 = arith.addf %33, %34 : vector<16x128xf32>
    %36 = math.tanh %35 : vector<16x128xf32>
    %37 = arith.truncf %36 : vector<16x128xf32> to vector<16x128xbf16>
    %c2 = arith.constant 2 : index
    %c0_27 = arith.constant 0 : index
    %c0_28 = arith.constant 0 : index
    %38 = vector.load %arg4[%c2, %c0_27, %c0_28] : memref<4x128x128xbf16, #tpu.memory_space<vmem>>, vector<1x128x128xbf16>
    %39 = vector.shape_cast %38 : vector<1x128x128xbf16> to vector<128x128xbf16>
    %c3 = arith.constant 3 : index
    %c0_29 = arith.constant 0 : index
    %c0_30 = arith.constant 0 : index
    %40 = vector.load %arg4[%c3, %c0_29, %c0_30] : memref<4x128x128xbf16, #tpu.memory_space<vmem>>, vector<1x128x128xbf16>
    %41 = vector.shape_cast %40 : vector<1x128x128xbf16> to vector<128x128xbf16>
    %c2_31 = arith.constant 2 : index
    %c0_32 = arith.constant 0 : index
    %c0_33 = arith.constant 0 : index
    %42 = vector.load %arg5[%c2_31, %c0_32, %c0_33] : memref<3x1x128xf32, #tpu.memory_space<vmem>>, vector<1x1x128xf32>
    %43 = vector.shape_cast %42 : vector<1x1x128xf32> to vector<1x128xf32>
    %44 = vector.shape_cast %37 : vector<16x128xbf16> to vector<1x16x128xbf16>
    "tpu.trace_start"() <{level = 10 : i32, message = "bij,bjh->bih"}> : () -> ()
    %cst_34 = arith.constant dense<0.000000e+00> : vector<1x16x128xf32>
    %45 = tpu.matmul %0, %44, %cst_34 {dimension_numbers = #tpu.dot_dimension_numbers<[2], [1], [1], [2], [0, 0, 0, 1, 1, 2], [0], [0]>} : vector<1x16x16xbf16>, vector<1x16x128xbf16>, vector<1x16x128xf32> -> vector<1x16x128xf32>
    "tpu.trace_stop"() : () -> ()
    %46 = vector.shape_cast %45 : vector<1x16x128xf32> to vector<16x128xf32>
    %47 = arith.truncf %46 : vector<16x128xf32> to vector<16x128xbf16>
    %cst_35 = arith.constant dense<0.000000e+00> : vector<16x128xf32>
    %48 = tpu.matmul %47, %39, %cst_35 {dimension_numbers = #tpu.dot_dimension_numbers<[1], [0], [0], [1], [0, 0, 1, 1], [], []>} : vector<16x128xbf16>, vector<128x128xbf16>, vector<16x128xf32> -> vector<16x128xf32>
    %cst_36 = arith.constant dense<0.000000e+00> : vector<16x128xf32>
    %49 = tpu.matmul %37, %41, %cst_36 {dimension_numbers = #tpu.dot_dimension_numbers<[1], [0], [0], [1], [0, 0, 1, 1], [], []>} : vector<16x128xbf16>, vector<128x128xbf16>, vector<16x128xf32> -> vector<16x128xf32>
    %50 = arith.addf %48, %49 : vector<16x128xf32>
    %51 = vector.broadcast %43 : vector<1x128xf32> to vector<16x128xf32>
    %52 = arith.addf %50, %51 : vector<16x128xf32>
    %53 = math.tanh %52 : vector<16x128xf32>
    %54 = vector.shape_cast %53 : vector<16x128xf32> to vector<1x16x128xf32>
    %c0_37 = arith.constant 0 : index
    %c0_38 = arith.constant 0 : index
    %c0_39 = arith.constant 0 : index
    %55 = vector.load %arg6[%c0_37, %c0_38, %c0_39] : memref<1x16x128xf32, #tpu.memory_space<vmem>>, vector<1x16x128xf32>
    tpu.vector_store %arg6[%c0_37, %c0_38, %c0_39], %54 {strides = array<i32>} : memref<1x16x128xf32, #tpu.memory_space<vmem>>, vector<1x16x128xf32>,
    return
  }
  func.func @transform_0(%arg0: i32) -> (i32, i32, i32) {
    %c0_i32 = arith.constant 0 : i32
    %c0_i32_0 = arith.constant 0 : i32
    %c0_i32_1 = arith.constant 0 : i32
    return %arg0, %c0_i32, %c0_i32_0 : i32, i32, i32
  }
  func.func @transform_1(%arg0: i32) -> (i32, i32, i32) {
    %c0_i32 = arith.constant 0 : i32
    %c0_i32_0 = arith.constant 0 : i32
    %c0_i32_1 = arith.constant 0 : i32
    return %arg0, %c0_i32, %c0_i32_0 : i32, i32, i32
  }
  func.func @transform_2(%arg0: i32) -> (i32, i32, i32) {
    %c0_i32 = arith.constant 0 : i32
    %c0_i32_0 = arith.constant 0 : i32
    %c0_i32_1 = arith.constant 0 : i32
    %c0_i32_2 = arith.constant 0 : i32
    return %c0_i32, %c0_i32_0, %c0_i32_1 : i32, i32, i32
  }
  func.func @transform_3(%arg0: i32) -> (i32, i32, i32) {
    %c0_i32 = arith.constant 0 : i32
    %c0_i32_0 = arith.constant 0 : i32
    %c0_i32_1 = arith.constant 0 : i32
    %c0_i32_2 = arith.constant 0 : i32
    return %c0_i32, %c0_i32_0, %c0_i32_1 : i32, i32, i32
  }
  func.func @transform_4(%arg0: i32) -> (i32, i32, i32) {
    %c0_i32 = arith.constant 0 : i32
    %c0_i32_0 = arith.constant 0 : i32
    %c0_i32_1 = arith.constant 0 : i32
    %c0_i32_2 = arith.constant 0 : i32
    return %c0_i32, %c0_i32_0, %c0_i32_1 : i32, i32, i32
  }
  func.func @transform_5(%arg0: i32) -> (i32, i32, i32) {
    %c0_i32 = arith.constant 0 : i32
    %c0_i32_0 = arith.constant 0 : i32
    %c0_i32_1 = arith.constant 0 : i32
    return %arg0, %c0_i32, %c0_i32_0 : i32, i32, i32
  }
}

</mosaic_0001>

<llo_original>
// kernel: tpu_custom_call.1
$region0: #{tpu_custom_call.1}
  #allocation0 [shape = 'u32[]', space=smem, size = 0x4, offset = 0x4, fixed_abs, tag = 'smem constant byte address 0x4 - core index']
  #allocation1 [shape = 'u32[144,128]{1,0:T(1,128)}', space=vmem, size = 0x12000, scoped, tag = 'internal scratch']
  %s0 = inlined_call_operand.vmem [shape: f32[2,16,2], index: 0, kind: input, shape index: {}]
  %s1 = inlined_call_operand.vmem [shape: bf16[2,16,16], index: 1, kind: input, shape index: {}]
  %s2 = inlined_call_operand.vmem [shape: bf16[2,2,128], index: 2, kind: input, shape index: {}]
  %s3 = inlined_call_operand.hbm [shape: bf16[4,128,128], index: 3, kind: input, shape index: {}]
  %s4 = inlined_call_operand.vmem [shape: f32[3,1,128], index: 4, kind: input, shape index: {}]
  %s5 = inlined_call_operand.hbm [shape: f32[2,16,128], index: 5, kind: output, shape index: {}]
  %s6 = sld [smem:[#allocation0]]
  $region57: #{tpu_custom_call.1} parent=0
    _
  %s8 = ssub.s32 1, %s6
  %s9 = scalar_select 0, %s8, %s6
  $region1: #{tpu_custom_call.1} parent=0
    #allocation2 [shape = 'u8[131072]{0}', space=vmem, size = 0x20000, scoped, tag = 'input window, operand 3, single buffered']
    #allocation3 [shape = 's32[2]{0}', space=sflag, size = 0x8, scoped, tag = 'scoped memory for tpu_custom_call.1']
    #allocation4 [shape = 's32[2]{0}', space=sflag, size = 0x8, scoped, tag = 'scoped memory for tpu_custom_call.1']
    #allocation5 [shape = 'u8[16384]{0}', space=vmem, size = 0x4000, scoped, tag = 'output window, operand 0']
    %10 = vsyncpa [#allocation3], 0
    %11 = vsyncpa [#allocation4], 0
    %s12 = scalar_lea.sflag [#allocation4], 1
    %13 = vsyncpa %s12, 0
    loop: start=0, step=1, limit=4
    $region2: #{tpu_custom_call.1} parent=1 // loop_pre_header
      _
    $region3: #{tpu_custom_call.1} parent=1 // loop_header
      %s15 = sphi 0, %s19
      %p16 = scmp.ge.s32.totalorder %s15, 4
      %s25 = sphi 0, %s27
      %s28 = sphi 0, %s25
      %s29 = sphi 0, %s28
      %s45 = sphi 0, %s29
      %s51 = sphi 0, %s53
      %s54 = sphi 0, %s51
      %s55 = sphi 0, %s54
      %s71 = sphi 0, %s55
      %s75 = sphi 0, %s75
      %s77 = sphi 0, %s75
      %s78 = sphi 0, %s77
      %s92 = sphi 0, %s78
      %s96 = sphi 0, %s96
      %s98 = sphi 0, %s96
      %s99 = sphi 0, %s98
      %s113 = sphi 0, %s99
      %s117 = sphi 0, %s117
      %s119 = sphi 0, %s117
      %s120 = sphi 0, %s119
      %s134 = sphi 0, %s120
      %s140 = sphi 0, %s142
      %s143 = sphi 0, %s140
      %s144 = sphi 0, %s143
      %s160 = sphi 0, %s144
    $region4: #{tpu_custom_call.1} parent=1 // loop_header_branch
      %18 = sbr.rel (%p16) target = $region8
    $region5: #{tpu_custom_call.1} parent=1 // loop_body
      %s20 = ssub.s32 %s15, 1
      %s21 = ssub.s32 %s15, 2
      %s22 = sadd.s32 %s15, 1
      %s23 = ssub.s32 %s15, %s22
      %p24 = scmp.eq.s32.totalorder %s23, 0
      %s26 = sadd.s32 %s25, 1
      %s27 = scalar_select %p24, %s25, %s26
      %p30 = pneg %p24
      %p31 = scmp.eq.s32.totalorder %s15, 1
      %p32 = por %p30, %p31
      %p33 = scmp.ne.s32.totalorder %s25, %s28
      %p34 = scmp.eq.s32.totalorder %s15, 0
      %p35 = por %p33, %p34
      %p36 = scmp.ne.s32.totalorder %s25, %s28
      %p37 = scmp.eq.s32.totalorder %s20, 1
      %p38 = por %p36, %p37
      %p39 = scmp.ne.s32.totalorder %s28, %s29
      %p40 = scmp.eq.s32.totalorder %s20, 0
      %p41 = por %p39, %p40
      %p42 = scmp.ne.s32.totalorder %s28, %s29
      %p43 = scmp.eq.s32.totalorder %s21, 1
      %p44 = por %p42, %p43
      %p46 = scmp.ne.s32.totalorder %s29, %s45
      %p47 = scmp.eq.s32.totalorder %s21, 0
      %p48 = por %p46, %p47
      %s49 = ssub.s32 %s15, %s22
      %p50 = scmp.eq.s32.totalorder %s49, 0
      %s52 = sadd.s32 %s51, 1
      %s53 = scalar_select %p50, %s51, %s52
      %p56 = pneg %p50
      %p57 = scmp.eq.s32.totalorder %s15, 1
      %p58 = por %p56, %p57
      %p59 = scmp.ne.s32.totalorder %s51, %s54
      %p60 = scmp.eq.s32.totalorder %s15, 0
      %p61 = por %p59, %p60
      %p62 = scmp.ne.s32.totalorder %s51, %s54
      %p63 = scmp.eq.s32.totalorder %s20, 1
      %p64 = por %p62, %p63
      %p65 = scmp.ne.s32.totalorder %s54, %s55
      %p66 = scmp.eq.s32.totalorder %s20, 0
      %p67 = por %p65, %p66
      %p68 = scmp.ne.s32.totalorder %s54, %s55
      %p69 = scmp.eq.s32.totalorder %s21, 1
      %p70 = por %p68, %p69
      %p72 = scmp.ne.s32.totalorder %s55, %s71
      %p73 = scmp.eq.s32.totalorder %s21, 0
      %p74 = por %p72, %p73
      %s76 = sadd.s32 %s75, 1
      %p79 = scmp.eq.s32.totalorder %s15, 1
      %p80 = scmp.ne.s32.totalorder %s75, %s77
      %p81 = scmp.eq.s32.totalorder %s15, 0
      %p82 = por %p80, %p81
      %p83 = scmp.ne.s32.totalorder %s75, %s77
      %p84 = scmp.eq.s32.totalorder %s20, 1
      %p85 = por %p83, %p84
      %p86 = scmp.ne.s32.totalorder %s77, %s78
      %p87 = scmp.eq.s32.totalorder %s20, 0
      %p88 = por %p86, %p87
      %p89 = scmp.ne.s32.totalorder %s77, %s78
      %p90 = scmp.eq.s32.totalorder %s21, 1
      %p91 = por %p89, %p90
      %p93 = scmp.ne.s32.totalorder %s78, %s92
      %p94 = scmp.eq.s32.totalorder %s21, 0
      %p95 = por %p93, %p94
      %s97 = sadd.s32 %s96, 1
      %p100 = scmp.eq.s32.totalorder %s15, 1
      %p101 = scmp.ne.s32.totalorder %s96, %s98
      %p102 = scmp.eq.s32.totalorder %s15, 0
      %p103 = por %p101, %p102
      %p104 = scmp.ne.s32.totalorder %s96, %s98
      %p105 = scmp.eq.s32.totalorder %s20, 1
      %p106 = por %p104, %p105
      %p107 = scmp.ne.s32.totalorder %s98, %s99
      %p108 = scmp.eq.s32.totalorder %s20, 0
      %p109 = por %p107, %p108
      %p110 = scmp.ne.s32.totalorder %s98, %s99
      %p111 = scmp.eq.s32.totalorder %s21, 1
      %p112 = por %p110, %p111
      %p114 = scmp.ne.s32.totalorder %s99, %s113
      %p115 = scmp.eq.s32.totalorder %s21, 0
      %p116 = por %p114, %p115
      %s118 = sadd.s32 %s117, 1
      %p121 = scmp.eq.s32.totalorder %s15, 1
      %p122 = scmp.ne.s32.totalorder %s117, %s119
      %p123 = scmp.eq.s32.totalorder %s15, 0
      %p124 = por %p122, %p123
      %p125 = scmp.ne.s32.totalorder %s117, %s119
      %p126 = scmp.eq.s32.totalorder %s20, 1
      %p127 = por %p125, %p126
      %p128 = scmp.ne.s32.totalorder %s119, %s120
      %p129 = scmp.eq.s32.totalorder %s20, 0
      %p130 = por %p128, %p129
      %p131 = scmp.ne.s32.totalorder %s119, %s120
      %p132 = scmp.eq.s32.totalorder %s21, 1
      %p133 = por %p131, %p132
      %p135 = scmp.ne.s32.totalorder %s120, %s134
      %p136 = scmp.eq.s32.totalorder %s21, 0
      %p137 = por %p135, %p136
      %s138 = ssub.s32 %s15, %s22
      %p139 = scmp.eq.s32.totalorder %s138, 0
      %s141 = sadd.s32 %s140, 1
      %s142 = scalar_select %p139, %s140, %s141
      %p145 = pneg %p139
      %p146 = scmp.eq.s32.totalorder %s15, 1
      %p147 = por %p145, %p146
      %p148 = scmp.ne.s32.totalorder %s140, %s143
      %p149 = scmp.eq.s32.totalorder %s15, 0
      %p150 = por %p148, %p149
      %p151 = scmp.ne.s32.totalorder %s140, %s143
      %p152 = scmp.eq.s32.totalorder %s20, 1
      %p153 = por %p151, %p152
      %p154 = scmp.ne.s32.totalorder %s143, %s144
      %p155 = scmp.eq.s32.totalorder %s20, 0
      %p156 = por %p154, %p155
      %p157 = scmp.ne.s32.totalorder %s143, %s144
      %p158 = scmp.eq.s32.totalorder %s21, 1
      %p159 = por %p157, %p158
      %p161 = scmp.ne.s32.totalorder %s144, %s160
      %p162 = scmp.eq.s32.totalorder %s21, 0
      %p163 = por %p161, %p162
      %p164 = scmp.le.s32.totalorder 1, %s15
      %p165 = scmp.lt.s32.totalorder %s15, 3
      %p166 = pnand %p164, %p165
      %p167 = pneg %p166
      // Predicated region
      $region9: #{tpu_custom_call.1} parent=5 // pred_check
        _
      $region10: #{tpu_custom_call.1} parent=5 // pred_check_branch
        %169 = sbr.rel (%p166) target = $region12
      $region11: #{tpu_custom_call.1} parent=5 // pred_region
        %s170 = ssub.s32 %s15, 1
        // Predicated region
        $region13: #{tpu_custom_call.1} parent=11 // pred_check
          %p171 = pneg %p88
        $region14: #{tpu_custom_call.1} parent=11 // pred_check_branch
          %173 = sbr.rel (%p171) target = $region16
        $region15: #{tpu_custom_call.1} parent=11 // pred_region
          _
        $region16: #{tpu_custom_call.1} parent=11 // pred_fallthru
          _
        // Predicated region
        $region17: #{tpu_custom_call.1} parent=11 // pred_check
          %p174 = pneg %p109
        $region18: #{tpu_custom_call.1} parent=11 // pred_check_branch
          %176 = sbr.rel (%p174) target = $region20
        $region19: #{tpu_custom_call.1} parent=11 // pred_region
          %s178 = ssub.s32 4096, 4096
          %179 = vsyncadd [#allocation3], %s178
          %s180 = sshll.u32 [#allocation2], 4
          %s181 = int_to_ptr.vmem [resolvable:$true] %s180
          %186 = dma.hbm_to_vmem [thread:$0]  %s3, 4096, %s181, [#allocation3], 64, 64, 4
        $region20: #{tpu_custom_call.1} parent=11 // pred_fallthru
          _
        // Predicated region
        $region21: #{tpu_custom_call.1} parent=11 // pred_check
          %p187 = pneg %p130
        $region22: #{tpu_custom_call.1} parent=11 // pred_check_branch
          %189 = sbr.rel (%p187) target = $region24
        $region23: #{tpu_custom_call.1} parent=11 // pred_region
          _
        $region24: #{tpu_custom_call.1} parent=11 // pred_fallthru
          _
      $region12: #{tpu_custom_call.1} parent=5 // pred_fallthru
        _
      %p190 = scmp.lt.s32.totalorder %s15, 2
      // Predicated region
      $region25: #{tpu_custom_call.1} parent=5 // pred_check
        %p191 = pneg %p190
      $region26: #{tpu_custom_call.1} parent=5 // pred_check_branch
        %193 = sbr.rel (%p191) target = $region28
      $region27: #{tpu_custom_call.1} parent=5 // pred_region
        // Predicated region
        $region29: #{tpu_custom_call.1} parent=27 // pred_check
          %p194 = pneg %p35
        $region30: #{tpu_custom_call.1} parent=27 // pred_check_branch
          %196 = sbr.rel (%p194) target = $region32
        $region31: #{tpu_custom_call.1} parent=27 // pred_region
          %p197 = scmp.lt.s32.totalorder %s15, 1
          %s198 = scalar_select %p197, %s15, 1
          %s199 = smul.addr %s198, 2
          %s200 = smul.addr %s199, 8
          %s201 = scalar_lea.vmem %s0, %s200
        $region32: #{tpu_custom_call.1} parent=27 // pred_fallthru
          _
        // Predicated region
        $region33: #{tpu_custom_call.1} parent=27 // pred_check
          %p202 = pneg %p61
        $region34: #{tpu_custom_call.1} parent=27 // pred_check_branch
          %204 = sbr.rel (%p202) target = $region36
        $region35: #{tpu_custom_call.1} parent=27 // pred_region
          %p205 = scmp.lt.s32.totalorder %s15, 1
          %s206 = scalar_select %p205, %s15, 1
          %s207 = smul.addr %s206, 2
          %s208 = smul.addr %s207, 4
          %s209 = scalar_lea.vmem %s1, %s208
        $region36: #{tpu_custom_call.1} parent=27 // pred_fallthru
          _
      $region28: #{tpu_custom_call.1} parent=5 // pred_fallthru
        _
      %p210 = scmp.le.s32.totalorder 1, %s15
      %p211 = scmp.lt.s32.totalorder %s15, 3
      %p212 = pnand %p210, %p211
      %p213 = pneg %p212
      // Predicated region
      $region37: #{tpu_custom_call.1} parent=5 // pred_check
        _
      $region38: #{tpu_custom_call.1} parent=5 // pred_check_branch
        %215 = sbr.rel (%p212) target = $region40
      $region39: #{tpu_custom_call.1} parent=5 // pred_region
        %s216 = ssub.s32 %s15, 1
        // Predicated region
        $region41: #{tpu_custom_call.1} parent=39 // pred_check
          %p217 = pneg %p109
        $region42: #{tpu_custom_call.1} parent=39 // pred_check_branch
          %219 = sbr.rel (%p217) target = $region44
        $region43: #{tpu_custom_call.1} parent=39 // pred_region
          %220 = dma.done [#allocation3], 4096
        $region44: #{tpu_custom_call.1} parent=39 // pred_fallthru
          _
        %p221 = scmp.lt.s32.totalorder %s20, 1
        %s222 = scalar_select %p221, %s20, 1
        %s223 = smul.addr %s222, 2
        %s224 = smul.addr %s223, 8
        %s225 = scalar_lea.vmem %s0, %s224
        %p226 = pneg %p41
        %p227 = pneg %p38
        %p228 = scmp.lt.s32.totalorder %s20, 1
        %s229 = scalar_select %p228, %s20, 1
        %s230 = smul.addr %s229, 2
        %s231 = smul.addr %s230, 4
        %s232 = scalar_lea.vmem %s1, %s231
        %p233 = pneg %p67
        %p234 = pneg %p64
        %p235 = pneg %p88
        %p236 = pneg %p85
        %p237 = pneg %p109
        %p238 = pneg %p106
        %p239 = pneg %p130
        %p240 = pneg %p127
        %p241 = pneg %p156
        %p242 = pneg %p153
        %s243 = sand.u32 %s143, 1
        %s244 = scalar_lea.sflag [#allocation4], %s243
        %s245 = sand.u32 %s143, 1
        %s246 = smul.addr %s245, 16
        %s247 = scalar_lea.vmem [#allocation5], %s246
        %p248 = scmp.lt.s32.totalorder %s20, 1
        %s249 = scalar_select %p248, %s20, 1
        %s250 = smul.addr %s249, 2
        %s251 = smul.addr %s250, 8
        %s252 = scalar_lea.vmem %s0, %s251
        %p253 = scmp.lt.s32.totalorder %s20, 1
        %s254 = scalar_select %p253, %s20, 1
        %s255 = smul.addr %s254, 2
        %s256 = smul.addr %s255, 4
        %s257 = scalar_lea.vmem %s1, %s256
        %v259 = vld [vmem:[%s257] sm:$0xf]
        %v260 = vld [vmem:[%s257 + $0x4] sm:$0xf]
        %v261 = vld [vmem:[%s252] sm:$0xff]
        %v262 = vld [vmem:[%s252 + $0x8] sm:$0xff]
        %v263 = vpack.c.bf16 %v262, %v261
        %v264 = vld [vmem:[%s2] sm:$0x1]
        %vm265 = vcmask 15360
        %v267 = vsel %vm265, %v263, 0
        %vm269 = vcmask 1040384
        %v271 = vsel %vm269, %v264, 0
        %273 = vmatprep.subr.bf16.mxu0 0
        %274 = vmatpush1.bf16.msra.mxu0 %v271
        %275 = vmatprep.subr.bf16.mxu0 0
        %276 = vmatpush1.bf16.msra.mxu0 0
        %277 = vmatprep.subr.bf16.mxu0 0
        %278 = vmatpush1.bf16.msra.mxu0 0
        %279 = vmatprep.subr.bf16.mxu0 0
        %280 = vmatpush1.bf16.msra.mxu0 0
        %281 = vmatprep.subr.bf16.mxu0 0
        %282 = vmatpush1.bf16.msra.mxu0 0
        %283 = vmatprep.subr.bf16.mxu0 0
        %284 = vmatpush1.bf16.msra.mxu0 0
        %285 = vmatprep.subr.bf16.mxu0 0
        %286 = vmatpush1.bf16.msra.mxu0 0
        %287 = vmatprep.subr.bf16.mxu0 0
        %288 = vmatpush1.bf16.msra.mxu0 0
        %289 = vmatprep.subr.bf16.mxu0 0
        %290 = vmatpush1.bf16.msra.mxu0 0
        %291 = vmatprep.subr.bf16.mxu0 0
        %292 = vmatpush1.bf16.msra.mxu0 0
        %293 = vmatprep.subr.bf16.mxu0 0
        %294 = vmatpush1.bf16.msra.mxu0 0
        %295 = vmatprep.subr.bf16.mxu0 0
        %296 = vmatpush1.bf16.msra.mxu0 0
        %297 = vmatprep.subr.bf16.mxu0 0
        %298 = vmatpush1.bf16.msra.mxu0 0
        %299 = vmatprep.subr.bf16.mxu0 0
        %300 = vmatpush1.bf16.msra.mxu0 0
        %301 = vmatprep.subr.bf16.mxu0 0
        %302 = vmatpush1.bf16.msra.mxu0 0
        %303 = vmatprep.subr.bf16.mxu0 0
        %304 = vmatpush1.bf16.msra.mxu0 0
        %305 = vmatprep.mubr.bf16.mxu0 0
        %306 = vmatmul.mubr.bf16.gmra.mrb[0].mxu0 %v267
        %v307 = vpop.f32.mrb[0].mxu0
        %v308 = vadd.f32 0.0, %v307
        %v309 = vpop.f32.mrb[0].mxu0
        %v310 = vpop.f32.mrb[0].mxu0
        %v311 = vadd.f32 0.0, %v310
        %v312 = vpop.f32.mrb[0].mxu0
        %313 = vdwg.mxu0
        %s314 = scalar_lea.vmem %s2, 1
        %v315 = vld [vmem:[%s314] sm:$0x1]
        %v317 = vsel %vm269, %v315, 0
        %319 = vmatprep.subr.bf16.mxu0 0
        %320 = vmatpush1.bf16.msra.mxu0 %v317
        %321 = vmatprep.subr.bf16.mxu0 0
        %322 = vmatpush1.bf16.msra.mxu0 0
        %323 = vmatprep.subr.bf16.mxu0 0
        %324 = vmatpush1.bf16.msra.mxu0 0
        %325 = vmatprep.subr.bf16.mxu0 0
        %326 = vmatpush1.bf16.msra.mxu0 0
        %327 = vmatprep.subr.bf16.mxu0 0
        %328 = vmatpush1.bf16.msra.mxu0 0
        %329 = vmatprep.subr.bf16.mxu0 0
        %330 = vmatpush1.bf16.msra.mxu0 0
        %331 = vmatprep.subr.bf16.mxu0 0
        %332 = vmatpush1.bf16.msra.mxu0 0
        %333 = vmatprep.subr.bf16.mxu0 0
        %334 = vmatpush1.bf16.msra.mxu0 0
        %335 = vmatprep.subr.bf16.mxu0 0
        %336 = vmatpush1.bf16.msra.mxu0 0
        %337 = vmatprep.subr.bf16.mxu0 0
        %338 = vmatpush1.bf16.msra.mxu0 0
        %339 = vmatprep.subr.bf16.mxu0 0
        %340 = vmatpush1.bf16.msra.mxu0 0
        %341 = vmatprep.subr.bf16.mxu0 0
        %342 = vmatpush1.bf16.msra.mxu0 0
        %343 = vmatprep.subr.bf16.mxu0 0
        %344 = vmatpush1.bf16.msra.mxu0 0
        %345 = vmatprep.subr.bf16.mxu0 0
        %346 = vmatpush1.bf16.msra.mxu0 0
        %347 = vmatprep.subr.bf16.mxu0 0
        %348 = vmatpush1.bf16.msra.mxu0 0
        %349 = vmatprep.subr.bf16.mxu0 0
        %350 = vmatpush1.bf16.msra.mxu0 0
        %351 = vmatprep.mubr.bf16.mxu0 0
        %352 = vmatmul.mubr.bf16.gmra.mrb[0].mxu0 %v267
        %v353 = vpop.f32.mrb[0].mxu0
        %v354 = vadd.f32 0.0, %v353
        %v355 = vpop.f32.mrb[0].mxu0
        %v356 = vpop.f32.mrb[0].mxu0
        %v357 = vadd.f32 0.0, %v356
        %v358 = vpop.f32.mrb[0].mxu0
        %359 = vdwg.mxu0
        %v360 = vpack.c.bf16 %v311, %v308
        %v363 = vunpack.c.l.b16 %v259
        %v364 = vunpack.c.l.b16 %v260
        %v365 = vpack.c.b16 %v364, %v363
        %vm366 = vcmask 130048
        %v368 = vsel %vm366, %v365, 0
        %370 = vmatprep.subr.bf16.mxu0 0
        %371 = vmatpush1.bf16.msra.mxu0 %v360
        %372 = vmatprep.subr.bf16.mxu0 0
        %373 = vmatpush1.bf16.msra.mxu0 0
        %374 = vmatprep.subr.bf16.mxu0 0
        %375 = vmatpush1.bf16.msra.mxu0 0
        %376 = vmatprep.subr.bf16.mxu0 0
        %377 = vmatpush1.bf16.msra.mxu0 0
        %378 = vmatprep.subr.bf16.mxu0 0
        %379 = vmatpush1.bf16.msra.mxu0 0
        %380 = vmatprep.subr.bf16.mxu0 0
        %381 = vmatpush1.bf16.msra.mxu0 0
        %382 = vmatprep.subr.bf16.mxu0 0
        %383 = vmatpush1.bf16.msra.mxu0 0
        %384 = vmatprep.subr.bf16.mxu0 0
        %385 = vmatpush1.bf16.msra.mxu0 0
        %386 = vmatprep.subr.bf16.mxu0 0
        %387 = vmatpush1.bf16.msra.mxu0 0
        %388 = vmatprep.subr.bf16.mxu0 0
        %389 = vmatpush1.bf16.msra.mxu0 0
        %390 = vmatprep.subr.bf16.mxu0 0
        %391 = vmatpush1.bf16.msra.mxu0 0
        %392 = vmatprep.subr.bf16.mxu0 0
        %393 = vmatpush1.bf16.msra.mxu0 0
        %394 = vmatprep.subr.bf16.mxu0 0
        %395 = vmatpush1.bf16.msra.mxu0 0
        %396 = vmatprep.subr.bf16.mxu0 0
        %397 = vmatpush1.bf16.msra.mxu0 0
        %398 = vmatprep.subr.bf16.mxu0 0
        %399 = vmatpush1.bf16.msra.mxu0 0
        %400 = vmatprep.subr.bf16.mxu0 0
        %401 = vmatpush1.bf16.msra.mxu0 0
        %402 = vmatprep.mubr.bf16.mxu0 0
        %403 = vmatmul.mubr.bf16.gmra.mrb[0].mxu0 %v368
        %v404 = vpop.f32.mrb[0].mxu0
        %v405 = vadd.f32 %v354, %v404
        %v406 = vpop.f32.mrb[0].mxu0
        %v407 = vpop.f32.mrb[0].mxu0
        %v408 = vadd.f32 %v357, %v407
        %v409 = vpop.f32.mrb[0].mxu0
        %410 = vdwg.mxu0
        %v411 = vld [vmem:[%s4] sm:$0x1]
        %v413 = vlaneseq
        %v414 = vshrl.u32 %v413, 7
        %v415 = vsub.s32 0, %v414
        %v416 = vrot.slane %v411, %v415
        %v418 = vadd.f32 %v405, %v416
        %v419 = vadd.f32 %v408, %v416
        %v420 = vtanh.pop %v418
        %v421 = vtanh.pop %v419
        %v422 = vpack.c.bf16 %v421, %v420
        %v423 = vld [vmem:[#allocation2] sm:$0xf]
        %v424 = vld [vmem:[#allocation2 + $0x4] sm:$0xf]
        %v425 = vld [vmem:[#allocation2 + $0x8] sm:$0xf]
        %v426 = vld [vmem:[#allocation2 + $0xc] sm:$0xf]
        %v427 = vld [vmem:[#allocation2 + $0x10] sm:$0xf]
        %v428 = vld [vmem:[#allocation2 + $0x14] sm:$0xf]
        %v429 = vld [vmem:[#allocation2 + $0x18] sm:$0xf]
        %v430 = vld [vmem:[#allocation2 + $0x1c] sm:$0xf]
        %v431 = vld [vmem:[#allocation2 + $0x20] sm:$0xf]
        %v432 = vld [vmem:[#allocation2 + $0x24] sm:$0xf]
        %v433 = vld [vmem:[#allocation2 + $0x28] sm:$0xf]
        %v434 = vld [vmem:[#allocation2 + $0x2c] sm:$0xf]
        %v435 = vld [vmem:[#allocation2 + $0x30] sm:$0xf]
        %v436 = vld [vmem:[#allocation2 + $0x34] sm:$0xf]
        %v437 = vld [vmem:[#allocation2 + $0x38] sm:$0xf]
        %v438 = vld [vmem:[#allocation2 + $0x3c] sm:$0xf]
        %s439 = scalar_lea.vmem [#allocation2], 64
        %v440 = vld [vmem:[%s439] sm:$0xf]
        %v441 = vld [vmem:[%s439 + $0x4] sm:$0xf]
        %v442 = vld [vmem:[%s439 + $0x8] sm:$0xf]
        %v443 = vld [vmem:[%s439 + $0xc] sm:$0xf]
        %v444 = vld [vmem:[%s439 + $0x10] sm:$0xf]
        %v445 = vld [vmem:[%s439 + $0x14] sm:$0xf]
        %v446 = vld [vmem:[%s439 + $0x18] sm:$0xf]
        %v447 = vld [vmem:[%s439 + $0x1c] sm:$0xf]
        %v448 = vld [vmem:[%s439 + $0x20] sm:$0xf]
        %v449 = vld [vmem:[%s439 + $0x24] sm:$0xf]
        %v450 = vld [vmem:[%s439 + $0x28] sm:$0xf]
        %v451 = vld [vmem:[%s439 + $0x2c] sm:$0xf]
        %v452 = vld [vmem:[%s439 + $0x30] sm:$0xf]
        %v453 = vld [vmem:[%s439 + $0x34] sm:$0xf]
        %v454 = vld [vmem:[%s439 + $0x38] sm:$0xf]
        %v455 = vld [vmem:[%s439 + $0x3c] sm:$0xf]
        %s456 = scalar_lea.vmem %s4, 1
        %v457 = vld [vmem:[%s456] sm:$0x1]
        %458 = vmatprep.subr.bf16.mxu0 0
        %459 = vmatpush1.bf16.msra.mxu0 %v422
        %460 = vmatprep.subr.bf16.mxu0 0
        %461 = vmatpush1.bf16.msra.mxu0 0
        %462 = vmatprep.subr.bf16.mxu0 0
        %463 = vmatpush1.bf16.msra.mxu0 0
        %464 = vmatprep.subr.bf16.mxu0 0
        %465 = vmatpush1.bf16.msra.mxu0 0
        %466 = vmatprep.subr.bf16.mxu0 0
        %467 = vmatpush1.bf16.msra.mxu0 0
        %468 = vmatprep.subr.bf16.mxu0 0
        %469 = vmatpush1.bf16.msra.mxu0 0
        %470 = vmatprep.subr.bf16.mxu0 0
        %471 = vmatpush1.bf16.msra.mxu0 0
        %472 = vmatprep.subr.bf16.mxu0 0
        %473 = vmatpush1.bf16.msra.mxu0 0
        %474 = vmatprep.subr.bf16.mxu0 0
        %475 = vmatpush1.bf16.msra.mxu0 0
        %476 = vmatprep.subr.bf16.mxu0 0
        %477 = vmatpush1.bf16.msra.mxu0 0
        %478 = vmatprep.subr.bf16.mxu0 0
        %479 = vmatpush1.bf16.msra.mxu0 0
        %480 = vmatprep.subr.bf16.mxu0 0
        %481 = vmatpush1.bf16.msra.mxu0 0
        %482 = vmatprep.subr.bf16.mxu0 0
        %483 = vmatpush1.bf16.msra.mxu0 0
        %484 = vmatprep.subr.bf16.mxu0 0
        %485 = vmatpush1.bf16.msra.mxu0 0
        %486 = vmatprep.subr.bf16.mxu0 0
        %487 = vmatpush1.bf16.msra.mxu0 0
        %488 = vmatprep.subr.bf16.mxu0 0
        %489 = vmatpush1.bf16.msra.mxu0 0
        %490 = vmatprep.mubr.bf16.mxu0 0
        %491 = vmatmul.mubr.bf16.gmra.mrb[0].mxu0 %v368
        %v492 = vpop.f32.mrb[0].mxu0
        %v493 = vadd.f32 0.0, %v492
        %v494 = vpop.f32.mrb[0].mxu0
        %v495 = vpop.f32.mrb[0].mxu0
        %v496 = vadd.f32 0.0, %v495
        %v497 = vpop.f32.mrb[0].mxu0
        %498 = vdwg.mxu0
        %v499 = vpack.c.bf16 %v496, %v493
        %v516 = vunpack.c.l.b16 %v440
        %v517 = vunpack.c.l.b16 %v441
        %v518 = vunpack.c.l.b16 %v442
        %v519 = vunpack.c.l.b16 %v443
        %v520 = vunpack.c.l.b16 %v444
        %v521 = vunpack.c.l.b16 %v445
        %v522 = vunpack.c.l.b16 %v446
        %v523 = vunpack.c.l.b16 %v447
        %v524 = vunpack.c.l.b16 %v448
        %v525 = vunpack.c.l.b16 %v449
        %v526 = vunpack.c.l.b16 %v450
        %v527 = vunpack.c.l.b16 %v451
        %v528 = vunpack.c.l.b16 %v452
        %v529 = vunpack.c.l.b16 %v453
        %v530 = vunpack.c.l.b16 %v454
        %v531 = vunpack.c.l.b16 %v455
        %v532 = vpack.c.b16 %v517, %v516
        %v533 = vpack.c.b16 %v519, %v518
        %v534 = vpack.c.b16 %v521, %v520
        %v535 = vpack.c.b16 %v523, %v522
        %v536 = vpack.c.b16 %v525, %v524
        %v537 = vpack.c.b16 %v527, %v526
        %v538 = vpack.c.b16 %v529, %v528
        %v539 = vpack.c.b16 %v531, %v530
        %548 = vmatprep.subr.bf16.mxu0 0
        %549 = vmatpush1.bf16.msra.mxu0 %v532
        %550 = vmatprep.subr.bf16.mxu0 0
        %551 = vmatpush1.bf16.msra.mxu0 %v533
        %552 = vmatprep.subr.bf16.mxu0 0
        %553 = vmatpush1.bf16.msra.mxu0 %v534
        %554 = vmatprep.subr.bf16.mxu0 0
        %555 = vmatpush1.bf16.msra.mxu0 %v535
        %556 = vmatprep.subr.bf16.mxu0 0
        %557 = vmatpush1.bf16.msra.mxu0 %v536
        %558 = vmatprep.subr.bf16.mxu0 0
        %559 = vmatpush1.bf16.msra.mxu0 %v537
        %560 = vmatprep.subr.bf16.mxu0 0
        %561 = vmatpush1.bf16.msra.mxu0 %v538
        %562 = vmatprep.subr.bf16.mxu0 0
        %563 = vmatpush1.bf16.msra.mxu0 %v539
        %564 = vmatprep.subr.bf16.mxu0 0
        %565 = vmatpush1.bf16.msra.mxu0 0
        %566 = vmatprep.subr.bf16.mxu0 0
        %567 = vmatpush1.bf16.msra.mxu0 0
        %568 = vmatprep.subr.bf16.mxu0 0
        %569 = vmatpush1.bf16.msra.mxu0 0
        %570 = vmatprep.subr.bf16.mxu0 0
        %571 = vmatpush1.bf16.msra.mxu0 0
        %572 = vmatprep.subr.bf16.mxu0 0
        %573 = vmatpush1.bf16.msra.mxu0 0
        %574 = vmatprep.subr.bf16.mxu0 0
        %575 = vmatpush1.bf16.msra.mxu0 0
        %576 = vmatprep.subr.bf16.mxu0 0
        %577 = vmatpush1.bf16.msra.mxu0 0
        %578 = vmatprep.subr.bf16.mxu0 0
        %579 = vmatpush1.bf16.msra.mxu0 0
        %580 = vmatprep.mubr.bf16.mxu0 0
        %581 = vmatmul.mubr.bf16.gmra.mrb[0].mxu0 %v422
        %v582 = vpop.f32.mrb[0].mxu0
        %v583 = vadd.f32 0.0, %v582
        %v584 = vpop.f32.mrb[0].mxu0
        %v585 = vpop.f32.mrb[0].mxu0
        %v586 = vadd.f32 0.0, %v585
        %v587 = vpop.f32.mrb[0].mxu0
        %588 = vdwg.mxu0
        %v605 = vunpack.c.l.b16 %v423
        %v606 = vunpack.c.l.b16 %v424
        %v607 = vunpack.c.l.b16 %v425
        %v608 = vunpack.c.l.b16 %v426
        %v609 = vunpack.c.l.b16 %v427
        %v610 = vunpack.c.l.b16 %v428
        %v611 = vunpack.c.l.b16 %v429
        %v612 = vunpack.c.l.b16 %v430
        %v613 = vunpack.c.l.b16 %v431
        %v614 = vunpack.c.l.b16 %v432
        %v615 = vunpack.c.l.b16 %v433
        %v616 = vunpack.c.l.b16 %v434
        %v617 = vunpack.c.l.b16 %v435
        %v618 = vunpack.c.l.b16 %v436
        %v619 = vunpack.c.l.b16 %v437
        %v620 = vunpack.c.l.b16 %v438
        %v621 = vpack.c.b16 %v606, %v605
        %v622 = vpack.c.b16 %v608, %v607
        %v623 = vpack.c.b16 %v610, %v609
        %v624 = vpack.c.b16 %v612, %v611
        %v625 = vpack.c.b16 %v614, %v613
        %v626 = vpack.c.b16 %v616, %v615
        %v627 = vpack.c.b16 %v618, %v617
        %v628 = vpack.c.b16 %v620, %v619
        %637 = vmatprep.subr.bf16.mxu0 0
        %638 = vmatpush1.bf16.msra.mxu0 %v621
        %639 = vmatprep.subr.bf16.mxu0 0
        %640 = vmatpush1.bf16.msra.mxu0 %v622
        %641 = vmatprep.subr.bf16.mxu0 0
        %642 = vmatpush1.bf16.msra.mxu0 %v623
        %643 = vmatprep.subr.bf16.mxu0 0
        %644 = vmatpush1.bf16.msra.mxu0 %v624
        %645 = vmatprep.subr.bf16.mxu0 0
        %646 = vmatpush1.bf16.msra.mxu0 %v625
        %647 = vmatprep.subr.bf16.mxu0 0
        %648 = vmatpush1.bf16.msra.mxu0 %v626
        %649 = vmatprep.subr.bf16.mxu0 0
        %650 = vmatpush1.bf16.msra.mxu0 %v627
        %651 = vmatprep.subr.bf16.mxu0 0
        %652 = vmatpush1.bf16.msra.mxu0 %v628
        %653 = vmatprep.subr.bf16.mxu0 0
        %654 = vmatpush1.bf16.msra.mxu0 0
        %655 = vmatprep.subr.bf16.mxu0 0
        %656 = vmatpush1.bf16.msra.mxu0 0
        %657 = vmatprep.subr.bf16.mxu0 0
        %658 = vmatpush1.bf16.msra.mxu0 0
        %659 = vmatprep.subr.bf16.mxu0 0
        %660 = vmatpush1.bf16.msra.mxu0 0
        %661 = vmatprep.subr.bf16.mxu0 0
        %662 = vmatpush1.bf16.msra.mxu0 0
        %663 = vmatprep.subr.bf16.mxu0 0
        %664 = vmatpush1.bf16.msra.mxu0 0
        %665 = vmatprep.subr.bf16.mxu0 0
        %666 = vmatpush1.bf16.msra.mxu0 0
        %667 = vmatprep.subr.bf16.mxu0 0
        %668 = vmatpush1.bf16.msra.mxu0 0
        %669 = vmatprep.mubr.bf16.mxu0 0
        %670 = vmatmul.mubr.bf16.gmra.mrb[0].mxu0 %v499
        %v671 = vpop.f32.mrb[0].mxu0
        %v672 = vadd.f32 %v583, %v671
        %v673 = vpop.f32.mrb[0].mxu0
        %v674 = vpop.f32.mrb[0].mxu0
        %v675 = vadd.f32 %v586, %v674
        %v676 = vpop.f32.mrb[0].mxu0
        %677 = vdwg.mxu0
        %v679 = vlaneseq
        %v680 = vshrl.u32 %v679, 7
        %v681 = vsub.s32 0, %v680
        %v682 = vrot.slane %v457, %v681
        %v684 = vadd.f32 %v672, %v682
        %v685 = vadd.f32 %v675, %v682
        %v686 = vtanh.pop %v684
        %v687 = vtanh.pop %v685
        %v688 = vpack.c.bf16 %v687, %v686
        %s689 = scalar_lea.vmem [#allocation2], 128
        %v690 = vld [vmem:[%s689] sm:$0xf]
        %v691 = vld [vmem:[%s689 + $0x4] sm:$0xf]
        %v692 = vld [vmem:[%s689 + $0x8] sm:$0xf]
        %v693 = vld [vmem:[%s689 + $0xc] sm:$0xf]
        %v694 = vld [vmem:[%s689 + $0x10] sm:$0xf]
        %v695 = vld [vmem:[%s689 + $0x14] sm:$0xf]
        %v696 = vld [vmem:[%s689 + $0x18] sm:$0xf]
        %v697 = vld [vmem:[%s689 + $0x1c] sm:$0xf]
        %v698 = vld [vmem:[%s689 + $0x20] sm:$0xf]
        %v699 = vld [vmem:[%s689 + $0x24] sm:$0xf]
        %v700 = vld [vmem:[%s689 + $0x28] sm:$0xf]
        %v701 = vld [vmem:[%s689 + $0x2c] sm:$0xf]
        %v702 = vld [vmem:[%s689 + $0x30] sm:$0xf]
        %v703 = vld [vmem:[%s689 + $0x34] sm:$0xf]
        %v704 = vld [vmem:[%s689 + $0x38] sm:$0xf]
        %v705 = vld [vmem:[%s689 + $0x3c] sm:$0xf]
        %s706 = scalar_lea.vmem [#allocation2], 192
        %v707 = vld [vmem:[%s706] sm:$0xf]
        %v708 = vld [vmem:[%s706 + $0x4] sm:$0xf]
        %v709 = vld [vmem:[%s706 + $0x8] sm:$0xf]
        %v710 = vld [vmem:[%s706 + $0xc] sm:$0xf]
        %v711 = vld [vmem:[%s706 + $0x10] sm:$0xf]
        %v712 = vld [vmem:[%s706 + $0x14] sm:$0xf]
        %v713 = vld [vmem:[%s706 + $0x18] sm:$0xf]
        %v714 = vld [vmem:[%s706 + $0x1c] sm:$0xf]
        %v715 = vld [vmem:[%s706 + $0x20] sm:$0xf]
        %v716 = vld [vmem:[%s706 + $0x24] sm:$0xf]
        %v717 = vld [vmem:[%s706 + $0x28] sm:$0xf]
        %v718 = vld [vmem:[%s706 + $0x2c] sm:$0xf]
        %v719 = vld [vmem:[%s706 + $0x30] sm:$0xf]
        %v720 = vld [vmem:[%s706 + $0x34] sm:$0xf]
        %v721 = vld [vmem:[%s706 + $0x38] sm:$0xf]
        %v722 = vld [vmem:[%s706 + $0x3c] sm:$0xf]
        %s723 = scalar_lea.vmem %s4, 2
        %v724 = vld [vmem:[%s723] sm:$0x1]
        %725 = vmatprep.subr.bf16.mxu0 0
        %726 = vmatpush1.bf16.msra.mxu0 %v688
        %727 = vmatprep.subr.bf16.mxu0 0
        %728 = vmatpush1.bf16.msra.mxu0 0
        %729 = vmatprep.subr.bf16.mxu0 0
        %730 = vmatpush1.bf16.msra.mxu0 0
        %731 = vmatprep.subr.bf16.mxu0 0
        %732 = vmatpush1.bf16.msra.mxu0 0
        %733 = vmatprep.subr.bf16.mxu0 0
        %734 = vmatpush1.bf16.msra.mxu0 0
        %735 = vmatprep.subr.bf16.mxu0 0
        %736 = vmatpush1.bf16.msra.mxu0 0
        %737 = vmatprep.subr.bf16.mxu0 0
        %738 = vmatpush1.bf16.msra.mxu0 0
        %739 = vmatprep.subr.bf16.mxu0 0
        %740 = vmatpush1.bf16.msra.mxu0 0
        %741 = vmatprep.subr.bf16.mxu0 0
        %742 = vmatpush1.bf16.msra.mxu0 0
        %743 = vmatprep.subr.bf16.mxu0 0
        %744 = vmatpush1.bf16.msra.mxu0 0
        %745 = vmatprep.subr.bf16.mxu0 0
        %746 = vmatpush1.bf16.msra.mxu0 0
        %747 = vmatprep.subr.bf16.mxu0 0
        %748 = vmatpush1.bf16.msra.mxu0 0
        %749 = vmatprep.subr.bf16.mxu0 0
        %750 = vmatpush1.bf16.msra.mxu0 0
        %751 = vmatprep.subr.bf16.mxu0 0
        %752 = vmatpush1.bf16.msra.mxu0 0
        %753 = vmatprep.subr.bf16.mxu0 0
        %754 = vmatpush1.bf16.msra.mxu0 0
        %755 = vmatprep.subr.bf16.mxu0 0
        %756 = vmatpush1.bf16.msra.mxu0 0
        %757 = vmatprep.mubr.bf16.mxu0 0
        %758 = vmatmul.mubr.bf16.gmra.mrb[0].mxu0 %v368
        %v759 = vpop.f32.mrb[0].mxu0
        %v760 = vadd.f32 0.0, %v759
        %v761 = vpop.f32.mrb[0].mxu0
        %v762 = vpop.f32.mrb[0].mxu0
        %v763 = vadd.f32 0.0, %v762
        %v764 = vpop.f32.mrb[0].mxu0
        %765 = vdwg.mxu0
        %v766 = vpack.c.bf16 %v763, %v760
        %v783 = vunpack.c.l.b16 %v707
        %v784 = vunpack.c.l.b16 %v708
        %v785 = vunpack.c.l.b16 %v709
        %v786 = vunpack.c.l.b16 %v710
        %v787 = vunpack.c.l.b16 %v711
        %v788 = vunpack.c.l.b16 %v712
        %v789 = vunpack.c.l.b16 %v713
        %v790 = vunpack.c.l.b16 %v714
        %v791 = vunpack.c.l.b16 %v715
        %v792 = vunpack.c.l.b16 %v716
        %v793 = vunpack.c.l.b16 %v717
        %v794 = vunpack.c.l.b16 %v718
        %v795 = vunpack.c.l.b16 %v719
        %v796 = vunpack.c.l.b16 %v720
        %v797 = vunpack.c.l.b16 %v721
        %v798 = vunpack.c.l.b16 %v722
        %v799 = vpack.c.b16 %v784, %v783
        %v800 = vpack.c.b16 %v786, %v785
        %v801 = vpack.c.b16 %v788, %v787
        %v802 = vpack.c.b16 %v790, %v789
        %v803 = vpack.c.b16 %v792, %v791
        %v804 = vpack.c.b16 %v794, %v793
        %v805 = vpack.c.b16 %v796, %v795
        %v806 = vpack.c.b16 %v798, %v797
        %815 = vmatprep.subr.bf16.mxu0 0
        %816 = vmatpush1.bf16.msra.mxu0 %v799
        %817 = vmatprep.subr.bf16.mxu0 0
        %818 = vmatpush1.bf16.msra.mxu0 %v800
        %819 = vmatprep.subr.bf16.mxu0 0
        %820 = vmatpush1.bf16.msra.mxu0 %v801
        %821 = vmatprep.subr.bf16.mxu0 0
        %822 = vmatpush1.bf16.msra.mxu0 %v802
        %823 = vmatprep.subr.bf16.mxu0 0
        %824 = vmatpush1.bf16.msra.mxu0 %v803
        %825 = vmatprep.subr.bf16.mxu0 0
        %826 = vmatpush1.bf16.msra.mxu0 %v804
        %827 = vmatprep.subr.bf16.mxu0 0
        %828 = vmatpush1.bf16.msra.mxu0 %v805
        %829 = vmatprep.subr.bf16.mxu0 0
        %830 = vmatpush1.bf16.msra.mxu0 %v806
        %831 = vmatprep.subr.bf16.mxu0 0
        %832 = vmatpush1.bf16.msra.mxu0 0
        %833 = vmatprep.subr.bf16.mxu0 0
        %834 = vmatpush1.bf16.msra.mxu0 0
        %835 = vmatprep.subr.bf16.mxu0 0
        %836 = vmatpush1.bf16.msra.mxu0 0
        %837 = vmatprep.subr.bf16.mxu0 0
        %838 = vmatpush1.bf16.msra.mxu0 0
        %839 = vmatprep.subr.bf16.mxu0 0
        %840 = vmatpush1.bf16.msra.mxu0 0
        %841 = vmatprep.subr.bf16.mxu0 0
        %842 = vmatpush1.bf16.msra.mxu0 0
        %843 = vmatprep.subr.bf16.mxu0 0
        %844 = vmatpush1.bf16.msra.mxu0 0
        %845 = vmatprep.subr.bf16.mxu0 0
        %846 = vmatpush1.bf16.msra.mxu0 0
        %847 = vmatprep.mubr.bf16.mxu0 0
        %848 = vmatmul.mubr.bf16.gmra.mrb[0].mxu0 %v688
        %v849 = vpop.f32.mrb[0].mxu0
        %v850 = vadd.f32 0.0, %v849
        %v851 = vpop.f32.mrb[0].mxu0
        %v852 = vpop.f32.mrb[0].mxu0
        %v853 = vadd.f32 0.0, %v852
        %v854 = vpop.f32.mrb[0].mxu0
        %855 = vdwg.mxu0
        %v872 = vunpack.c.l.b16 %v690
        %v873 = vunpack.c.l.b16 %v691
        %v874 = vunpack.c.l.b16 %v692
        %v875 = vunpack.c.l.b16 %v693
        %v876 = vunpack.c.l.b16 %v694
        %v877 = vunpack.c.l.b16 %v695
        %v878 = vunpack.c.l.b16 %v696
        %v879 = vunpack.c.l.b16 %v697
        %v880 = vunpack.c.l.b16 %v698
        %v881 = vunpack.c.l.b16 %v699
        %v882 = vunpack.c.l.b16 %v700
        %v883 = vunpack.c.l.b16 %v701
        %v884 = vunpack.c.l.b16 %v702
        %v885 = vunpack.c.l.b16 %v703
        %v886 = vunpack.c.l.b16 %v704
        %v887 = vunpack.c.l.b16 %v705
        %v888 = vpack.c.b16 %v873, %v872
        %v889 = vpack.c.b16 %v875, %v874
        %v890 = vpack.c.b16 %v877, %v876
        %v891 = vpack.c.b16 %v879, %v878
        %v892 = vpack.c.b16 %v881, %v880
        %v893 = vpack.c.b16 %v883, %v882
        %v894 = vpack.c.b16 %v885, %v884
        %v895 = vpack.c.b16 %v887, %v886
        %904 = vmatprep.subr.bf16.mxu0 0
        %905 = vmatpush1.bf16.msra.mxu0 %v888
        %906 = vmatprep.subr.bf16.mxu0 0
        %907 = vmatpush1.bf16.msra.mxu0 %v889
        %908 = vmatprep.subr.bf16.mxu0 0
        %909 = vmatpush1.bf16.msra.mxu0 %v890
        %910 = vmatprep.subr.bf16.mxu0 0
        %911 = vmatpush1.bf16.msra.mxu0 %v891
        %912 = vmatprep.subr.bf16.mxu0 0
        %913 = vmatpush1.bf16.msra.mxu0 %v892
        %914 = vmatprep.subr.bf16.mxu0 0
        %915 = vmatpush1.bf16.msra.mxu0 %v893
        %916 = vmatprep.subr.bf16.mxu0 0
        %917 = vmatpush1.bf16.msra.mxu0 %v894
        %918 = vmatprep.subr.bf16.mxu0 0
        %919 = vmatpush1.bf16.msra.mxu0 %v895
        %920 = vmatprep.subr.bf16.mxu0 0
        %921 = vmatpush1.bf16.msra.mxu0 0
        %922 = vmatprep.subr.bf16.mxu0 0
        %923 = vmatpush1.bf16.msra.mxu0 0
        %924 = vmatprep.subr.bf16.mxu0 0
        %925 = vmatpush1.bf16.msra.mxu0 0
        %926 = vmatprep.subr.bf16.mxu0 0
        %927 = vmatpush1.bf16.msra.mxu0 0
        %928 = vmatprep.subr.bf16.mxu0 0
        %929 = vmatpush1.bf16.msra.mxu0 0
        %930 = vmatprep.subr.bf16.mxu0 0
        %931 = vmatpush1.bf16.msra.mxu0 0
        %932 = vmatprep.subr.bf16.mxu0 0
        %933 = vmatpush1.bf16.msra.mxu0 0
        %934 = vmatprep.subr.bf16.mxu0 0
        %935 = vmatpush1.bf16.msra.mxu0 0
        %936 = vmatprep.mubr.bf16.mxu0 0
        %937 = vmatmul.mubr.bf16.gmra.mrb[0].mxu0 %v766
        %v938 = vpop.f32.mrb[0].mxu0
        %v939 = vadd.f32 %v850, %v938
        %v940 = vpop.f32.mrb[0].mxu0
        %v941 = vpop.f32.mrb[0].mxu0
        %v942 = vadd.f32 %v853, %v941
        %v943 = vpop.f32.mrb[0].mxu0
        %944 = vdwg.mxu0
        %v946 = vlaneseq
        %v947 = vshrl.u32 %v946, 7
        %v948 = vsub.s32 0, %v947
        %v949 = vrot.slane %v724, %v948
        %v951 = vadd.f32 %v939, %v949
        %v952 = vadd.f32 %v942, %v949
        %v953 = vtanh.pop %v951
        %v954 = vtanh.pop %v952
        %955 = vst [vmem:[%s247] sm:$0xff] %v953
        %956 = vst [vmem:[%s247 + $0x8] sm:$0xff] %v954
        %s957 = sand.u32 %s143, 1
        %s958 = scalar_lea.sflag [#allocation4], %s957
        %s959 = sand.u32 %s143, 1
        %s960 = smul.addr %s959, 16
        %s961 = scalar_lea.vmem [#allocation5], %s960
        // Predicated region
        $region45: #{tpu_custom_call.1} parent=39 // pred_check
          %p962 = pneg %p153
        $region46: #{tpu_custom_call.1} parent=39 // pred_check_branch
          %964 = sbr.rel (%p962) target = $region48
        $region47: #{tpu_custom_call.1} parent=39 // pred_region
          %s966 = ssub.s32 256, 256
          %967 = vsyncadd %s958, %s966
          %s968 = smul.addr %s20, 2
          %s969 = smul.addr %s968, 128
          %s970 = scalar_lea.hbm %s5, %s969
          %s971 = sshll.u32 %s961, 4
          %s972 = int_to_ptr.vmem [resolvable:$true] %s971
          %977 = dma.vmem_to_hbm [thread:$0]  %s972, 256, %s970, %s958, 128, 128, 8
        $region48: #{tpu_custom_call.1} parent=39 // pred_fallthru
          _
      $region40: #{tpu_custom_call.1} parent=5 // pred_fallthru
        _
      %p978 = scmp.le.s32.totalorder 2, %s15
      // Predicated region
      $region49: #{tpu_custom_call.1} parent=5 // pred_check
        %p979 = pneg %p978
      $region50: #{tpu_custom_call.1} parent=5 // pred_check_branch
        %981 = sbr.rel (%p979) target = $region52
      $region51: #{tpu_custom_call.1} parent=5 // pred_region
        %s982 = ssub.s32 %s15, 2
        // Predicated region
        $region53: #{tpu_custom_call.1} parent=51 // pred_check
          %p983 = pneg %p159
        $region54: #{tpu_custom_call.1} parent=51 // pred_check_branch
          %985 = sbr.rel (%p983) target = $region56
        $region55: #{tpu_custom_call.1} parent=51 // pred_region
          %s986 = sand.u32 %s144, 1
          %s987 = scalar_lea.sflag [#allocation4], %s986
          %s988 = sand.u32 %s144, 1
          %s989 = smul.addr %s988, 16
          %s990 = scalar_lea.vmem [#allocation5], %s989
          %991 = dma.done %s987, 256
        $region56: #{tpu_custom_call.1} parent=51 // pred_fallthru
          _
      $region52: #{tpu_custom_call.1} parent=5 // pred_fallthru
        _
    $region6: #{tpu_custom_call.1} parent=1 // loop_footer
      %s19 = sadd.s32 1, %s15
    $region7: #{tpu_custom_call.1} parent=1 // loop_footer_branch
      %14 = sbr.rel target = $region3
    $region8: #{tpu_custom_call.1} parent=1 // loop_exit
      _
    %992 = vsyncpa [#allocation3], 1
    %s993 = scalar_lea.sflag [#allocation3], 1
    %994 = vsyncpa %s993, 1
    %995 = vsyncpa [#allocation4], 1
    %s996 = scalar_lea.sflag [#allocation4], 1
    %997 = vsyncpa %s996, 1

// kernel: tpu_custom_call.1
$region0: #{tpu_custom_call.1}
  #allocation0 [shape = 'u32[]', space=smem, size = 0x4, offset = 0x4, fixed_abs, tag = 'smem constant byte address 0x4 - core index']
  #allocation1 [shape = 'u32[144,128]{1,0:T(1,128)}', space=vmem, size = 0x12000, scoped, tag = 'internal scratch']
  %s0 = inlined_call_operand.vmem [shape: f32[2,16,2], index: 0, kind: input, shape index: {}]
  %s1 = inlined_call_operand.vmem [shape: bf16[2,16,16], index: 1, kind: input, shape index: {}]
  %s2 = inlined_call_operand.vmem [shape: bf16[2,2,128], index: 2, kind: input, shape index: {}]
  %s3 = inlined_call_operand.hbm [shape: bf16[4,128,128], index: 3, kind: input, shape index: {}]
  %s4 = inlined_call_operand.vmem [shape: f32[3,1,128], index: 4, kind: input, shape index: {}]
  %s5 = inlined_call_operand.hbm [shape: f32[2,16,128], index: 5, kind: output, shape index: {}]
  %s6 = sld [smem:[#allocation0]]
  $region57: #{tpu_custom_call.1} parent=0
    _
  %s8 = ssub.s32 1, %s6
  %s9 = scalar_select 0, %s8, %s6
  $region1: #{tpu_custom_call.1} parent=0
    #allocation2 [shape = 'u8[131072]{0}', space=vmem, size = 0x20000, scoped, tag = 'input window, operand 3, single buffered']
    #allocation3 [shape = 's32[2]{0}', space=sflag, size = 0x8, scoped, tag = 'scoped memory for tpu_custom_call.1']
    #allocation4 [shape = 's32[2]{0}', space=sflag, size = 0x8, scoped, tag = 'scoped memory for tpu_custom_call.1']
    #allocation5 [shape = 'u8[16384]{0}', space=vmem, size = 0x4000, scoped, tag = 'output window, operand 0']
    %10 = vsyncpa [#allocation3], 0
    %11 = vsyncpa [#allocation4], 0
    %s12 = scalar_lea.sflag [#allocation4], 1
    %13 = vsyncpa %s12, 0
    loop: start=0, step=1, limit=4
    $region2: #{tpu_custom_call.1} parent=1 // loop_pre_header
      _
    $region3: #{tpu_custom_call.1} parent=1 // loop_header
      %s15 = sphi 0, %s19
      %p16 = scmp.ge.s32.totalorder %s15, 4
      %s25 = sphi 0, %s27
      %s28 = sphi 0, %s25
      %s29 = sphi 0, %s28
      %s45 = sphi 0, %s29
      %s51 = sphi 0, %s53
      %s54 = sphi 0, %s51
      %s55 = sphi 0, %s54
      %s71 = sphi 0, %s55
      %s75 = sphi 0, %s75
      %s77 = sphi 0, %s75
      %s78 = sphi 0, %s77
      %s92 = sphi 0, %s78
      %s96 = sphi 0, %s96
      %s98 = sphi 0, %s96
      %s99 = sphi 0, %s98
      %s113 = sphi 0, %s99
      %s117 = sphi 0, %s117
      %s119 = sphi 0, %s117
      %s120 = sphi 0, %s119
      %s134 = sphi 0, %s120
      %s140 = sphi 0, %s142
      %s143 = sphi 0, %s140
      %s144 = sphi 0, %s143
      %s160 = sphi 0, %s144
    $region4: #{tpu_custom_call.1} parent=1 // loop_header_branch
      %18 = sbr.rel (%p16) target = $region8
    $region5: #{tpu_custom_call.1} parent=1 // loop_body
      %s20 = ssub.s32 %s15, 1
      %s21 = ssub.s32 %s15, 2
      %s22 = sadd.s32 %s15, 1
      %s23 = ssub.s32 %s15, %s22
      %p24 = scmp.eq.s32.totalorder %s23, 0
      %s26 = sadd.s32 %s25, 1
      %s27 = scalar_select %p24, %s25, %s26
      %p30 = pneg %p24
      %p31 = scmp.eq.s32.totalorder %s15, 1
      %p32 = por %p30, %p31
      %p33 = scmp.ne.s32.totalorder %s25, %s28
      %p34 = scmp.eq.s32.totalorder %s15, 0
      %p35 = por %p33, %p34
      %p36 = scmp.ne.s32.totalorder %s25, %s28
      %p37 = scmp.eq.s32.totalorder %s20, 1
      %p38 = por %p36, %p37
      %p39 = scmp.ne.s32.totalorder %s28, %s29
      %p40 = scmp.eq.s32.totalorder %s20, 0
      %p41 = por %p39, %p40
      %p42 = scmp.ne.s32.totalorder %s28, %s29
      %p43 = scmp.eq.s32.totalorder %s21, 1
      %p44 = por %p42, %p43
      %p46 = scmp.ne.s32.totalorder %s29, %s45
      %p47 = scmp.eq.s32.totalorder %s21, 0
      %p48 = por %p46, %p47
      %s49 = ssub.s32 %s15, %s22
      %p50 = scmp.eq.s32.totalorder %s49, 0
      %s52 = sadd.s32 %s51, 1
      %s53 = scalar_select %p50, %s51, %s52
      %p56 = pneg %p50
      %p57 = scmp.eq.s32.totalorder %s15, 1
      %p58 = por %p56, %p57
      %p59 = scmp.ne.s32.totalorder %s51, %s54
      %p60 = scmp.eq.s32.totalorder %s15, 0
      %p61 = por %p59, %p60
      %p62 = scmp.ne.s32.totalorder %s51, %s54
      %p63 = scmp.eq.s32.totalorder %s20, 1
      %p64 = por %p62, %p63
      %p65 = scmp.ne.s32.totalorder %s54, %s55
      %p66 = scmp.eq.s32.totalorder %s20, 0
      %p67 = por %p65, %p66
      %p68 = scmp.ne.s32.totalorder %s54, %s55
      %p69 = scmp.eq.s32.totalorder %s21, 1
      %p70 = por %p68, %p69
      %p72 = scmp.ne.s32.totalorder %s55, %s71
      %p73 = scmp.eq.s32.totalorder %s21, 0
      %p74 = por %p72, %p73
      %s76 = sadd.s32 %s75, 1
      %p79 = scmp.eq.s32.totalorder %s15, 1
      %p80 = scmp.ne.s32.totalorder %s75, %s77
      %p81 = scmp.eq.s32.totalorder %s15, 0
      %p82 = por %p80, %p81
      %p83 = scmp.ne.s32.totalorder %s75, %s77
      %p84 = scmp.eq.s32.totalorder %s20, 1
      %p85 = por %p83, %p84
      %p86 = scmp.ne.s32.totalorder %s77, %s78
      %p87 = scmp.eq.s32.totalorder %s20, 0
      %p88 = por %p86, %p87
      %p89 = scmp.ne.s32.totalorder %s77, %s78
      %p90 = scmp.eq.s32.totalorder %s21, 1
      %p91 = por %p89, %p90
      %p93 = scmp.ne.s32.totalorder %s78, %s92
      %p94 = scmp.eq.s32.totalorder %s21, 0
      %p95 = por %p93, %p94
      %s97 = sadd.s32 %s96, 1
      %p100 = scmp.eq.s32.totalorder %s15, 1
      %p101 = scmp.ne.s32.totalorder %s96, %s98
      %p102 = scmp.eq.s32.totalorder %s15, 0
      %p103 = por %p101, %p102
      %p104 = scmp.ne.s32.totalorder %s96, %s98
      %p105 = scmp.eq.s32.totalorder %s20, 1
      %p106 = por %p104, %p105
      %p107 = scmp.ne.s32.totalorder %s98, %s99
      %p108 = scmp.eq.s32.totalorder %s20, 0
      %p109 = por %p107, %p108
      %p110 = scmp.ne.s32.totalorder %s98, %s99
      %p111 = scmp.eq.s32.totalorder %s21, 1
      %p112 = por %p110, %p111
      %p114 = scmp.ne.s32.totalorder %s99, %s113
      %p115 = scmp.eq.s32.totalorder %s21, 0
      %p116 = por %p114, %p115
      %s118 = sadd.s32 %s117, 1
      %p121 = scmp.eq.s32.totalorder %s15, 1
      %p122 = scmp.ne.s32.totalorder %s117, %s119
      %p123 = scmp.eq.s32.totalorder %s15, 0
      %p124 = por %p122, %p123
      %p125 = scmp.ne.s32.totalorder %s117, %s119
      %p126 = scmp.eq.s32.totalorder %s20, 1
      %p127 = por %p125, %p126
      %p128 = scmp.ne.s32.totalorder %s119, %s120
      %p129 = scmp.eq.s32.totalorder %s20, 0
      %p130 = por %p128, %p129
      %p131 = scmp.ne.s32.totalorder %s119, %s120
      %p132 = scmp.eq.s32.totalorder %s21, 1
      %p133 = por %p131, %p132
      %p135 = scmp.ne.s32.totalorder %s120, %s134
      %p136 = scmp.eq.s32.totalorder %s21, 0
      %p137 = por %p135, %p136
      %s138 = ssub.s32 %s15, %s22
      %p139 = scmp.eq.s32.totalorder %s138, 0
      %s141 = sadd.s32 %s140, 1
      %s142 = scalar_select %p139, %s140, %s141
      %p145 = pneg %p139
      %p146 = scmp.eq.s32.totalorder %s15, 1
      %p147 = por %p145, %p146
      %p148 = scmp.ne.s32.totalorder %s140, %s143
      %p149 = scmp.eq.s32.totalorder %s15, 0
      %p150 = por %p148, %p149
      %p151 = scmp.ne.s32.totalorder %s140, %s143
      %p152 = scmp.eq.s32.totalorder %s20, 1
      %p153 = por %p151, %p152
      %p154 = scmp.ne.s32.totalorder %s143, %s144
      %p155 = scmp.eq.s32.totalorder %s20, 0
      %p156 = por %p154, %p155
      %p157 = scmp.ne.s32.totalorder %s143, %s144
      %p158 = scmp.eq.s32.totalorder %s21, 1
      %p159 = por %p157, %p158
      %p161 = scmp.ne.s32.totalorder %s144, %s160
      %p162 = scmp.eq.s32.totalorder %s21, 0
      %p163 = por %p161, %p162
      %p164 = scmp.le.s32.totalorder 1, %s15
      %p165 = scmp.lt.s32.totalorder %s15, 3
      %p166 = pnand %p164, %p165
      %p167 = pneg %p166
      // Predicated region
      $region9: #{tpu_custom_call.1} parent=5 // pred_check
        _
      $region10: #{tpu_custom_call.1} parent=5 // pred_check_branch
        %169 = sbr.rel (%p166) target = $region12
      $region11: #{tpu_custom_call.1} parent=5 // pred_region
        %s170 = ssub.s32 %s15, 1
        // Predicated region
        $region13: #{tpu_custom_call.1} parent=11 // pred_check
          %p171 = pneg %p88
        $region14: #{tpu_custom_call.1} parent=11 // pred_check_branch
          %173 = sbr.rel (%p171) target = $region16
        $region15: #{tpu_custom_call.1} parent=11 // pred_region
          _
        $region16: #{tpu_custom_call.1} parent=11 // pred_fallthru
          _
        // Predicated region
        $region17: #{tpu_custom_call.1} parent=11 // pred_check
          %p174 = pneg %p109
        $region18: #{tpu_custom_call.1} parent=11 // pred_check_branch
          %176 = sbr.rel (%p174) target = $region20
        $region19: #{tpu_custom_call.1} parent=11 // pred_region
          %s178 = ssub.s32 4096, 4096
          %179 = vsyncadd [#allocation3], %s178
          %s180 = sshll.u32 [#allocation2], 4
          %s181 = int_to_ptr.vmem [resolvable:$true] %s180
          %186 = dma.hbm_to_vmem [thread:$0]  %s3, 4096, %s181, [#allocation3], 64, 64, 4
        $region20: #{tpu_custom_call.1} parent=11 // pred_fallthru
          _
        // Predicated region
        $region21: #{tpu_custom_call.1} parent=11 // pred_check
          %p187 = pneg %p130
        $region22: #{tpu_custom_call.1} parent=11 // pred_check_branch
          %189 = sbr.rel (%p187) target = $region24
        $region23: #{tpu_custom_call.1} parent=11 // pred_region
          _
        $region24: #{tpu_custom_call.1} parent=11 // pred_fallthru
          _
      $region12: #{tpu_custom_call.1} parent=5 // pred_fallthru
        _
      %p190 = scmp.lt.s32.totalorder %s15, 2
      // Predicated region
      $region25: #{tpu_custom_call.1} parent=5 // pred_check
        %p191 = pneg %p190
      $region26: #{tpu_custom_call.1} parent=5 // pred_check_branch
        %193 = sbr.rel (%p191) target = $region28
      $region27: #{tpu_custom_call.1} parent=5 // pred_region
        // Predicated region
        $region29: #{tpu_custom_call.1} parent=27 // pred_check
          %p194 = pneg %p35
        $region30: #{tpu_custom_call.1} parent=27 // pred_check_branch
          %196 = sbr.rel (%p194) target = $region32
        $region31: #{tpu_custom_call.1} parent=27 // pred_region
          %p197 = scmp.lt.s32.totalorder %s15, 1
          %s198 = scalar_select %p197, %s15, 1
          %s199 = smul.addr %s198, 2
          %s200 = smul.addr %s199, 8
          %s201 = scalar_lea.vmem %s0, %s200
        $region32: #{tpu_custom_call.1} parent=27 // pred_fallthru
          _
        // Predicated region
        $region33: #{tpu_custom_call.1} parent=27 // pred_check
          %p202 = pneg %p61
        $region34: #{tpu_custom_call.1} parent=27 // pred_check_branch
          %204 = sbr.rel (%p202) target = $region36
        $region35: #{tpu_custom_call.1} parent=27 // pred_region
          %p205 = scmp.lt.s32.totalorder %s15, 1
          %s206 = scalar_select %p205, %s15, 1
          %s207 = smul.addr %s206, 2
          %s208 = smul.addr %s207, 4
          %s209 = scalar_lea.vmem %s1, %s208
        $region36: #{tpu_custom_call.1} parent=27 // pred_fallthru
          _
      $region28: #{tpu_custom_call.1} parent=5 // pred_fallthru
        _
      %p210 = scmp.le.s32.totalorder 1, %s15
      %p211 = scmp.lt.s32.totalorder %s15, 3
      %p212 = pnand %p210, %p211
      %p213 = pneg %p212
      // Predicated region
      $region37: #{tpu_custom_call.1} parent=5 // pred_check
        _
      $region38: #{tpu_custom_call.1} parent=5 // pred_check_branch
        %215 = sbr.rel (%p212) target = $region40
      $region39: #{tpu_custom_call.1} parent=5 // pred_region
        %s216 = ssub.s32 %s15, 1
        // Predicated region
        $region41: #{tpu_custom_call.1} parent=39 // pred_check
          %p217 = pneg %p109
        $region42: #{tpu_custom_call.1} parent=39 // pred_check_branch
          %219 = sbr.rel (%p217) target = $region44
        $region43: #{tpu_custom_call.1} parent=39 // pred_region
          %220 = dma.done [#allocation3], 4096
        $region44: #{tpu_custom_call.1} parent=39 // pred_fallthru
          _
        %p221 = scmp.lt.s32.totalorder %s20, 1
        %s222 = scalar_select %p221, %s20, 1
        %s223 = smul.addr %s222, 2
        %s224 = smul.addr %s223, 8
        %s225 = scalar_lea.vmem %s0, %s224
        %p226 = pneg %p41
        %p227 = pneg %p38
        %p228 = scmp.lt.s32.totalorder %s20, 1
        %s229 = scalar_select %p228, %s20, 1
        %s230 = smul.addr %s229, 2
        %s231 = smul.addr %s230, 4
        %s232 = scalar_lea.vmem %s1, %s231
        %p233 = pneg %p67
        %p234 = pneg %p64
        %p235 = pneg %p88
        %p236 = pneg %p85
        %p237 = pneg %p109
        %p238 = pneg %p106
        %p239 = pneg %p130
        %p240 = pneg %p127
        %p241 = pneg %p156
        %p242 = pneg %p153
        %s243 = sand.u32 %s143, 1
        %s244 = scalar_lea.sflag [#allocation4], %s243
        %s245 = sand.u32 %s143, 1
        %s246 = smul.addr %s245, 16
        %s247 = scalar_lea.vmem [#allocation5], %s246
        %p248 = scmp.lt.s32.totalorder %s20, 1
        %s249 = scalar_select %p248, %s20, 1
        %s250 = smul.addr %s249, 2
        %s251 = smul.addr %s250, 8
        %s252 = scalar_lea.vmem %s0, %s251
        %p253 = scmp.lt.s32.totalorder %s20, 1
        %s254 = scalar_select %p253, %s20, 1
        %s255 = smul.addr %s254, 2
        %s256 = smul.addr %s255, 4
        %s257 = scalar_lea.vmem %s1, %s256
        %v259 = vld [vmem:[%s257] sm:$0xf]
        %v260 = vld [vmem:[%s257 + $0x4] sm:$0xf]
        %v261 = vld [vmem:[%s252] sm:$0xff]
        %v262 = vld [vmem:[%s252 + $0x8] sm:$0xff]
        %v263 = vpack.c.bf16 %v262, %v261
        %v264 = vld [vmem:[%s2] sm:$0x1]
        %vm265 = vcmask 15360
        %v267 = vsel %vm265, %v263, 0
        %vm269 = vcmask 1040384
        %v271 = vsel %vm269, %v264, 0
        %273 = vmatprep.subr.bf16.mxu0 0
        %274 = vmatpush1.bf16.msra.mxu0 %v271
        %275 = vmatprep.subr.bf16.mxu0 0
        %276 = vmatpush1.bf16.msra.mxu0 0
        %277 = vmatprep.subr.bf16.mxu0 0
        %278 = vmatpush1.bf16.msra.mxu0 0
        %279 = vmatprep.subr.bf16.mxu0 0
        %280 = vmatpush1.bf16.msra.mxu0 0
        %281 = vmatprep.subr.bf16.mxu0 0
        %282 = vmatpush1.bf16.msra.mxu0 0
        %283 = vmatprep.subr.bf16.mxu0 0
        %284 = vmatpush1.bf16.msra.mxu0 0
        %285 = vmatprep.subr.bf16.mxu0 0
        %286 = vmatpush1.bf16.msra.mxu0 0
        %287 = vmatprep.subr.bf16.mxu0 0
        %288 = vmatpush1.bf16.msra.mxu0 0
        %289 = vmatprep.subr.bf16.mxu0 0
        %290 = vmatpush1.bf16.msra.mxu0 0
        %291 = vmatprep.subr.bf16.mxu0 0
        %292 = vmatpush1.bf16.msra.mxu0 0
        %293 = vmatprep.subr.bf16.mxu0 0
        %294 = vmatpush1.bf16.msra.mxu0 0
        %295 = vmatprep.subr.bf16.mxu0 0
        %296 = vmatpush1.bf16.msra.mxu0 0
        %297 = vmatprep.subr.bf16.mxu0 0
        %298 = vmatpush1.bf16.msra.mxu0 0
        %299 = vmatprep.subr.bf16.mxu0 0
        %300 = vmatpush1.bf16.msra.mxu0 0
        %301 = vmatprep.subr.bf16.mxu0 0
        %302 = vmatpush1.bf16.msra.mxu0 0
        %303 = vmatprep.subr.bf16.mxu0 0
        %304 = vmatpush1.bf16.msra.mxu0 0
        %305 = vmatprep.mubr.bf16.mxu0 0
        %306 = vmatmul.mubr.bf16.gmra.mrb[0].mxu0 %v267
        %v307 = vpop.f32.mrb[0].mxu0
        %v308 = vadd.f32 0.0, %v307
        %v309 = vpop.f32.mrb[0].mxu0
        %v310 = vpop.f32.mrb[0].mxu0
        %v311 = vadd.f32 0.0, %v310
        %v312 = vpop.f32.mrb[0].mxu0
        %313 = vdwg.mxu0
        %s314 = scalar_lea.vmem %s2, 1
        %v315 = vld [vmem:[%s314] sm:$0x1]
        %v317 = vsel %vm269, %v315, 0
        %319 = vmatprep.subr.bf16.mxu0 0
        %320 = vmatpush1.bf16.msra.mxu0 %v317
        %321 = vmatprep.subr.bf16.mxu0 0
        %322 = vmatpush1.bf16.msra.mxu0 0
        %323 = vmatprep.subr.bf16.mxu0 0
        %324 = vmatpush1.bf16.msra.mxu0 0
        %325 = vmatprep.subr.bf16.mxu0 0
        %326 = vmatpush1.bf16.msra.mxu0 0
        %327 = vmatprep.subr.bf16.mxu0 0
        %328 = vmatpush1.bf16.msra.mxu0 0
        %329 = vmatprep.subr.bf16.mxu0 0
        %330 = vmatpush1.bf16.msra.mxu0 0
        %331 = vmatprep.subr.bf16.mxu0 0
        %332 = vmatpush1.bf16.msra.mxu0 0
        %333 = vmatprep.subr.bf16.mxu0 0
        %334 = vmatpush1.bf16.msra.mxu0 0
        %335 = vmatprep.subr.bf16.mxu0 0
        %336 = vmatpush1.bf16.msra.mxu0 0
        %337 = vmatprep.subr.bf16.mxu0 0
        %338 = vmatpush1.bf16.msra.mxu0 0
        %339 = vmatprep.subr.bf16.mxu0 0
        %340 = vmatpush1.bf16.msra.mxu0 0
        %341 = vmatprep.subr.bf16.mxu0 0
        %342 = vmatpush1.bf16.msra.mxu0 0
        %343 = vmatprep.subr.bf16.mxu0 0
        %344 = vmatpush1.bf16.msra.mxu0 0
        %345 = vmatprep.subr.bf16.mxu0 0
        %346 = vmatpush1.bf16.msra.mxu0 0
        %347 = vmatprep.subr.bf16.mxu0 0
        %348 = vmatpush1.bf16.msra.mxu0 0
        %349 = vmatprep.subr.bf16.mxu0 0
        %350 = vmatpush1.bf16.msra.mxu0 0
        %351 = vmatprep.mubr.bf16.mxu0 0
        %352 = vmatmul.mubr.bf16.gmra.mrb[0].mxu0 %v267
        %v353 = vpop.f32.mrb[0].mxu0
        %v354 = vadd.f32 0.0, %v353
        %v355 = vpop.f32.mrb[0].mxu0
        %v356 = vpop.f32.mrb[0].mxu0
        %v357 = vadd.f32 0.0, %v356
        %v358 = vpop.f32.mrb[0].mxu0
        %359 = vdwg.mxu0
        %v360 = vpack.c.bf16 %v311, %v308
        %v363 = vunpack.c.l.b16 %v259
        %v364 = vunpack.c.l.b16 %v260
        %v365 = vpack.c.b16 %v364, %v363
        %vm366 = vcmask 130048
        %v368 = vsel %vm366, %v365, 0
        %370 = vmatprep.subr.bf16.mxu0 0
        %371 = vmatpush1.bf16.msra.mxu0 %v360
        %372 = vmatprep.subr.bf16.mxu0 0
        %373 = vmatpush1.bf16.msra.mxu0 0
        %374 = vmatprep.subr.bf16.mxu0 0
        %375 = vmatpush1.bf16.msra.mxu0 0
        %376 = vmatprep.subr.bf16.mxu0 0
        %377 = vmatpush1.bf16.msra.mxu0 0
        %378 = vmatprep.subr.bf16.mxu0 0
        %379 = vmatpush1.bf16.msra.mxu0 0
        %380 = vmatprep.subr.bf16.mxu0 0
        %381 = vmatpush1.bf16.msra.mxu0 0
        %382 = vmatprep.subr.bf16.mxu0 0
        %383 = vmatpush1.bf16.msra.mxu0 0
        %384 = vmatprep.subr.bf16.mxu0 0
        %385 = vmatpush1.bf16.msra.mxu0 0
        %386 = vmatprep.subr.bf16.mxu0 0
        %387 = vmatpush1.bf16.msra.mxu0 0
        %388 = vmatprep.subr.bf16.mxu0 0
        %389 = vmatpush1.bf16.msra.mxu0 0
        %390 = vmatprep.subr.bf16.mxu0 0
        %391 = vmatpush1.bf16.msra.mxu0 0
        %392 = vmatprep.subr.bf16.mxu0 0
        %393 = vmatpush1.bf16.msra.mxu0 0
        %394 = vmatprep.subr.bf16.mxu0 0
        %395 = vmatpush1.bf16.msra.mxu0 0
        %396 = vmatprep.subr.bf16.mxu0 0
        %397 = vmatpush1.bf16.msra.mxu0 0
        %398 = vmatprep.subr.bf16.mxu0 0
        %399 = vmatpush1.bf16.msra.mxu0 0
        %400 = vmatprep.subr.bf16.mxu0 0
        %401 = vmatpush1.bf16.msra.mxu0 0
        %402 = vmatprep.mubr.bf16.mxu0 0
        %403 = vmatmul.mubr.bf16.gmra.mrb[0].mxu0 %v368
        %v404 = vpop.f32.mrb[0].mxu0
        %v405 = vadd.f32 %v354, %v404
        %v406 = vpop.f32.mrb[0].mxu0
        %v407 = vpop.f32.mrb[0].mxu0
        %v408 = vadd.f32 %v357, %v407
        %v409 = vpop.f32.mrb[0].mxu0
        %410 = vdwg.mxu0
        %v411 = vld [vmem:[%s4] sm:$0x1]
        %v413 = vlaneseq
        %v414 = vshrl.u32 %v413, 7
        %v415 = vsub.s32 0, %v414
        %v416 = vrot.slane %v411, %v415
        %v418 = vadd.f32 %v405, %v416
        %v419 = vadd.f32 %v408, %v416
        %v420 = vtanh.pop %v418
        %v421 = vtanh.pop %v419
        %v422 = vpack.c.bf16 %v421, %v420
        %v423 = vld [vmem:[#allocation2] sm:$0xf]
        %v424 = vld [vmem:[#allocation2 + $0x4] sm:$0xf]
        %v425 = vld [vmem:[#allocation2 + $0x8] sm:$0xf]
        %v426 = vld [vmem:[#allocation2 + $0xc] sm:$0xf]
        %v427 = vld [vmem:[#allocation2 + $0x10] sm:$0xf]
        %v428 = vld [vmem:[#allocation2 + $0x14] sm:$0xf]
        %v429 = vld [vmem:[#allocation2 + $0x18] sm:$0xf]
        %v430 = vld [vmem:[#allocation2 + $0x1c] sm:$0xf]
        %v431 = vld [vmem:[#allocation2 + $0x20] sm:$0xf]
        %v432 = vld [vmem:[#allocation2 + $0x24] sm:$0xf]
        %v433 = vld [vmem:[#allocation2 + $0x28] sm:$0xf]
        %v434 = vld [vmem:[#allocation2 + $0x2c] sm:$0xf]
        %v435 = vld [vmem:[#allocation2 + $0x30] sm:$0xf]
        %v436 = vld [vmem:[#allocation2 + $0x34] sm:$0xf]
        %v437 = vld [vmem:[#allocation2 + $0x38] sm:$0xf]
        %v438 = vld [vmem:[#allocation2 + $0x3c] sm:$0xf]
        %s439 = scalar_lea.vmem [#allocation2], 64
        %v440 = vld [vmem:[%s439] sm:$0xf]
        %v441 = vld [vmem:[%s439 + $0x4] sm:$0xf]
        %v442 = vld [vmem:[%s439 + $0x8] sm:$0xf]
        %v443 = vld [vmem:[%s439 + $0xc] sm:$0xf]
        %v444 = vld [vmem:[%s439 + $0x10] sm:$0xf]
        %v445 = vld [vmem:[%s439 + $0x14] sm:$0xf]
        %v446 = vld [vmem:[%s439 + $0x18] sm:$0xf]
        %v447 = vld [vmem:[%s439 + $0x1c] sm:$0xf]
        %v448 = vld [vmem:[%s439 + $0x20] sm:$0xf]
        %v449 = vld [vmem:[%s439 + $0x24] sm:$0xf]
        %v450 = vld [vmem:[%s439 + $0x28] sm:$0xf]
        %v451 = vld [vmem:[%s439 + $0x2c] sm:$0xf]
        %v452 = vld [vmem:[%s439 + $0x30] sm:$0xf]
        %v453 = vld [vmem:[%s439 + $0x34] sm:$0xf]
        %v454 = vld [vmem:[%s439 + $0x38] sm:$0xf]
        %v455 = vld [vmem:[%s439 + $0x3c] sm:$0xf]
        %s456 = scalar_lea.vmem %s4, 1
        %v457 = vld [vmem:[%s456] sm:$0x1]
        %458 = vmatprep.subr.bf16.mxu0 0
        %459 = vmatpush1.bf16.msra.mxu0 %v422
        %460 = vmatprep.subr.bf16.mxu0 0
        %461 = vmatpush1.bf16.msra.mxu0 0
        %462 = vmatprep.subr.bf16.mxu0 0
        %463 = vmatpush1.bf16.msra.mxu0 0
        %464 = vmatprep.subr.bf16.mxu0 0
        %465 = vmatpush1.bf16.msra.mxu0 0
        %466 = vmatprep.subr.bf16.mxu0 0
        %467 = vmatpush1.bf16.msra.mxu0 0
        %468 = vmatprep.subr.bf16.mxu0 0
        %469 = vmatpush1.bf16.msra.mxu0 0
        %470 = vmatprep.subr.bf16.mxu0 0
        %471 = vmatpush1.bf16.msra.mxu0 0
        %472 = vmatprep.subr.bf16.mxu0 0
        %473 = vmatpush1.bf16.msra.mxu0 0
        %474 = vmatprep.subr.bf16.mxu0 0
        %475 = vmatpush1.bf16.msra.mxu0 0
        %476 = vmatprep.subr.bf16.mxu0 0
        %477 = vmatpush1.bf16.msra.mxu0 0
        %478 = vmatprep.subr.bf16.mxu0 0
        %479 = vmatpush1.bf16.msra.mxu0 0
        %480 = vmatprep.subr.bf16.mxu0 0
        %481 = vmatpush1.bf16.msra.mxu0 0
        %482 = vmatprep.subr.bf16.mxu0 0
        %483 = vmatpush1.bf16.msra.mxu0 0
        %484 = vmatprep.subr.bf16.mxu0 0
        %485 = vmatpush1.bf16.msra.mxu0 0
        %486 = vmatprep.subr.bf16.mxu0 0
        %487 = vmatpush1.bf16.msra.mxu0 0
        %488 = vmatprep.subr.bf16.mxu0 0
        %489 = vmatpush1.bf16.msra.mxu0 0
        %490 = vmatprep.mubr.bf16.mxu0 0
        %491 = vmatmul.mubr.bf16.gmra.mrb[0].mxu0 %v368
        %v492 = vpop.f32.mrb[0].mxu0
        %v493 = vadd.f32 0.0, %v492
        %v494 = vpop.f32.mrb[0].mxu0
        %v495 = vpop.f32.mrb[0].mxu0
        %v496 = vadd.f32 0.0, %v495
        %v497 = vpop.f32.mrb[0].mxu0
        %498 = vdwg.mxu0
        %v499 = vpack.c.bf16 %v496, %v493
        %v516 = vunpack.c.l.b16 %v440
        %v517 = vunpack.c.l.b16 %v441
        %v518 = vunpack.c.l.b16 %v442
        %v519 = vunpack.c.l.b16 %v443
        %v520 = vunpack.c.l.b16 %v444
        %v521 = vunpack.c.l.b16 %v445
        %v522 = vunpack.c.l.b16 %v446
        %v523 = vunpack.c.l.b16 %v447
        %v524 = vunpack.c.l.b16 %v448
        %v525 = vunpack.c.l.b16 %v449
        %v526 = vunpack.c.l.b16 %v450
        %v527 = vunpack.c.l.b16 %v451
        %v528 = vunpack.c.l.b16 %v452
        %v529 = vunpack.c.l.b16 %v453
        %v530 = vunpack.c.l.b16 %v454
        %v531 = vunpack.c.l.b16 %v455
        %v532 = vpack.c.b16 %v517, %v516
        %v533 = vpack.c.b16 %v519, %v518
        %v534 = vpack.c.b16 %v521, %v520
        %v535 = vpack.c.b16 %v523, %v522
        %v536 = vpack.c.b16 %v525, %v524
        %v537 = vpack.c.b16 %v527, %v526
        %v538 = vpack.c.b16 %v529, %v528
        %v539 = vpack.c.b16 %v531, %v530
        %548 = vmatprep.subr.bf16.mxu0 0
        %549 = vmatpush1.bf16.msra.mxu0 %v532
        %550 = vmatprep.subr.bf16.mxu0 0
        %551 = vmatpush1.bf16.msra.mxu0 %v533
        %552 = vmatprep.subr.bf16.mxu0 0
        %553 = vmatpush1.bf16.msra.mxu0 %v534
        %554 = vmatprep.subr.bf16.mxu0 0
        %555 = vmatpush1.bf16.msra.mxu0 %v535
        %556 = vmatprep.subr.bf16.mxu0 0
        %557 = vmatpush1.bf16.msra.mxu0 %v536
        %558 = vmatprep.subr.bf16.mxu0 0
        %559 = vmatpush1.bf16.msra.mxu0 %v537
        %560 = vmatprep.subr.bf16.mxu0 0
        %561 = vmatpush1.bf16.msra.mxu0 %v538
        %562 = vmatprep.subr.bf16.mxu0 0
        %563 = vmatpush1.bf16.msra.mxu0 %v539
        %564 = vmatprep.subr.bf16.mxu0 0
        %565 = vmatpush1.bf16.msra.mxu0 0
        %566 = vmatprep.subr.bf16.mxu0 0
        %567 = vmatpush1.bf16.msra.mxu0 0
        %568 = vmatprep.subr.bf16.mxu0 0
        %569 = vmatpush1.bf16.msra.mxu0 0
        %570 = vmatprep.subr.bf16.mxu0 0
        %571 = vmatpush1.bf16.msra.mxu0 0
        %572 = vmatprep.subr.bf16.mxu0 0
        %573 = vmatpush1.bf16.msra.mxu0 0
        %574 = vmatprep.subr.bf16.mxu0 0
        %575 = vmatpush1.bf16.msra.mxu0 0
        %576 = vmatprep.subr.bf16.mxu0 0
        %577 = vmatpush1.bf16.msra.mxu0 0
        %578 = vmatprep.subr.bf16.mxu0 0
        %579 = vmatpush1.bf16.msra.mxu0 0
        %580 = vmatprep.mubr.bf16.mxu0 0
        %581 = vmatmul.mubr.bf16.gmra.mrb[0].mxu0 %v422
        %v582 = vpop.f32.mrb[0].mxu0
        %v583 = vadd.f32 0.0, %v582
        %v584 = vpop.f32.mrb[0].mxu0
        %v585 = vpop.f32.mrb[0].mxu0
        %v586 = vadd.f32 0.0, %v585
        %v587 = vpop.f32.mrb[0].mxu0
        %588 = vdwg.mxu0
        %v605 = vunpack.c.l.b16 %v423
        %v606 = vunpack.c.l.b16 %v424
        %v607 = vunpack.c.l.b16 %v425
        %v608 = vunpack.c.l.b16 %v426
        %v609 = vunpack.c.l.b16 %v427
        %v610 = vunpack.c.l.b16 %v428
        %v611 = vunpack.c.l.b16 %v429
        %v612 = vunpack.c.l.b16 %v430
        %v613 = vunpack.c.l.b16 %v431
        %v614 = vunpack.c.l.b16 %v432
        %v615 = vunpack.c.l.b16 %v433
        %v616 = vunpack.c.l.b16 %v434
        %v617 = vunpack.c.l.b16 %v435
        %v618 = vunpack.c.l.b16 %v436
        %v619 = vunpack.c.l.b16 %v437
        %v620 = vunpack.c.l.b16 %v438
        %v621 = vpack.c.b16 %v606, %v605
        %v622 = vpack.c.b16 %v608, %v607
        %v623 = vpack.c.b16 %v610, %v609
        %v624 = vpack.c.b16 %v612, %v611
        %v625 = vpack.c.b16 %v614, %v613
        %v626 = vpack.c.b16 %v616, %v615
        %v627 = vpack.c.b16 %v618, %v617
        %v628 = vpack.c.b16 %v620, %v619
        %637 = vmatprep.subr.bf16.mxu0 0
        %638 = vmatpush1.bf16.msra.mxu0 %v621
        %639 = vmatprep.subr.bf16.mxu0 0
        %640 = vmatpush1.bf16.msra.mxu0 %v622
        %641 = vmatprep.subr.bf16.mxu0 0
        %642 = vmatpush1.bf16.msra.mxu0 %v623
        %643 = vmatprep.subr.bf16.mxu0 0
        %644 = vmatpush1.bf16.msra.mxu0 %v624
        %645 = vmatprep.subr.bf16.mxu0 0
        %646 = vmatpush1.bf16.msra.mxu0 %v625
        %647 = vmatprep.subr.bf16.mxu0 0
        %648 = vmatpush1.bf16.msra.mxu0 %v626
        %649 = vmatprep.subr.bf16.mxu0 0
        %650 = vmatpush1.bf16.msra.mxu0 %v627
        %651 = vmatprep.subr.bf16.mxu0 0
        %652 = vmatpush1.bf16.msra.mxu0 %v628
        %653 = vmatprep.subr.bf16.mxu0 0
        %654 = vmatpush1.bf16.msra.mxu0 0
        %655 = vmatprep.subr.bf16.mxu0 0
        %656 = vmatpush1.bf16.msra.mxu0 0
        %657 = vmatprep.subr.bf16.mxu0 0
        %658 = vmatpush1.bf16.msra.mxu0 0
        %659 = vmatprep.subr.bf16.mxu0 0
        %660 = vmatpush1.bf16.msra.mxu0 0
        %661 = vmatprep.subr.bf16.mxu0 0
        %662 = vmatpush1.bf16.msra.mxu0 0
        %663 = vmatprep.subr.bf16.mxu0 0
        %664 = vmatpush1.bf16.msra.mxu0 0
        %665 = vmatprep.subr.bf16.mxu0 0
        %666 = vmatpush1.bf16.msra.mxu0 0
        %667 = vmatprep.subr.bf16.mxu0 0
        %668 = vmatpush1.bf16.msra.mxu0 0
        %669 = vmatprep.mubr.bf16.mxu0 0
        %670 = vmatmul.mubr.bf16.gmra.mrb[0].mxu0 %v499
        %v671 = vpop.f32.mrb[0].mxu0
        %v672 = vadd.f32 %v583, %v671
        %v673 = vpop.f32.mrb[0].mxu0
        %v674 = vpop.f32.mrb[0].mxu0
        %v675 = vadd.f32 %v586, %v674
        %v676 = vpop.f32.mrb[0].mxu0
        %677 = vdwg.mxu0
        %v679 = vlaneseq
        %v680 = vshrl.u32 %v679, 7
        %v681 = vsub.s32 0, %v680
        %v682 = vrot.slane %v457, %v681
        %v684 = vadd.f32 %v672, %v682
        %v685 = vadd.f32 %v675, %v682
        %v686 = vtanh.pop %v684
        %v687 = vtanh.pop %v685
        %v688 = vpack.c.bf16 %v687, %v686
        %s689 = scalar_lea.vmem [#allocation2], 128
        %v690 = vld [vmem:[%s689] sm:$0xf]
        %v691 = vld [vmem:[%s689 + $0x4] sm:$0xf]
        %v692 = vld [vmem:[%s689 + $0x8] sm:$0xf]
        %v693 = vld [vmem:[%s689 + $0xc] sm:$0xf]
        %v694 = vld [vmem:[%s689 + $0x10] sm:$0xf]
        %v695 = vld [vmem:[%s689 + $0x14] sm:$0xf]
        %v696 = vld [vmem:[%s689 + $0x18] sm:$0xf]
        %v697 = vld [vmem:[%s689 + $0x1c] sm:$0xf]
        %v698 = vld [vmem:[%s689 + $0x20] sm:$0xf]
        %v699 = vld [vmem:[%s689 + $0x24] sm:$0xf]
        %v700 = vld [vmem:[%s689 + $0x28] sm:$0xf]
        %v701 = vld [vmem:[%s689 + $0x2c] sm:$0xf]
        %v702 = vld [vmem:[%s689 + $0x30] sm:$0xf]
        %v703 = vld [vmem:[%s689 + $0x34] sm:$0xf]
        %v704 = vld [vmem:[%s689 + $0x38] sm:$0xf]
        %v705 = vld [vmem:[%s689 + $0x3c] sm:$0xf]
        %s706 = scalar_lea.vmem [#allocation2], 192
        %v707 = vld [vmem:[%s706] sm:$0xf]
        %v708 = vld [vmem:[%s706 + $0x4] sm:$0xf]
        %v709 = vld [vmem:[%s706 + $0x8] sm:$0xf]
        %v710 = vld [vmem:[%s706 + $0xc] sm:$0xf]
        %v711 = vld [vmem:[%s706 + $0x10] sm:$0xf]
        %v712 = vld [vmem:[%s706 + $0x14] sm:$0xf]
        %v713 = vld [vmem:[%s706 + $0x18] sm:$0xf]
        %v714 = vld [vmem:[%s706 + $0x1c] sm:$0xf]
        %v715 = vld [vmem:[%s706 + $0x20] sm:$0xf]
        %v716 = vld [vmem:[%s706 + $0x24] sm:$0xf]
        %v717 = vld [vmem:[%s706 + $0x28] sm:$0xf]
        %v718 = vld [vmem:[%s706 + $0x2c] sm:$0xf]
        %v719 = vld [vmem:[%s706 + $0x30] sm:$0xf]
        %v720 = vld [vmem:[%s706 + $0x34] sm:$0xf]
        %v721 = vld [vmem:[%s706 + $0x38] sm:$0xf]
        %v722 = vld [vmem:[%s706 + $0x3c] sm:$0xf]
        %s723 = scalar_lea.vmem %s4, 2
        %v724 = vld [vmem:[%s723] sm:$0x1]
        %725 = vmatprep.subr.bf16.mxu0 0
        %726 = vmatpush1.bf16.msra.mxu0 %v688
        %727 = vmatprep.subr.bf16.mxu0 0
        %728 = vmatpush1.bf16.msra.mxu0 0
        %729 = vmatprep.subr.bf16.mxu0 0
        %730 = vmatpush1.bf16.msra.mxu0 0
        %731 = vmatprep.subr.bf16.mxu0 0
        %732 = vmatpush1.bf16.msra.mxu0 0
        %733 = vmatprep.subr.bf16.mxu0 0
        %734 = vmatpush1.bf16.msra.mxu0 0
        %735 = vmatprep.subr.bf16.mxu0 0
        %736 = vmatpush1.bf16.msra.mxu0 0
        %737 = vmatprep.subr.bf16.mxu0 0
        %738 = vmatpush1.bf16.msra.mxu0 0
        %739 = vmatprep.subr.bf16.mxu0 0
        %740 = vmatpush1.bf16.msra.mxu0 0
        %741 = vmatprep.subr.bf16.mxu0 0
        %742 = vmatpush1.bf16.msra.mxu0 0
        %743 = vmatprep.subr.bf16.mxu0 0
        %744 = vmatpush1.bf16.msra.mxu0 0
        %745 = vmatprep.subr.bf16.mxu0 0
        %746 = vmatpush1.bf16.msra.mxu0 0
        %747 = vmatprep.subr.bf16.mxu0 0
        %748 = vmatpush1.bf16.msra.mxu0 0
        %749 = vmatprep.subr.bf16.mxu0 0
        %750 = vmatpush1.bf16.msra.mxu0 0
        %751 = vmatprep.subr.bf16.mxu0 0
        %752 = vmatpush1.bf16.msra.mxu0 0
        %753 = vmatprep.subr.bf16.mxu0 0
        %754 = vmatpush1.bf16.msra.mxu0 0
        %755 = vmatprep.subr.bf16.mxu0 0
        %756 = vmatpush1.bf16.msra.mxu0 0
        %757 = vmatprep.mubr.bf16.mxu0 0
        %758 = vmatmul.mubr.bf16.gmra.mrb[0].mxu0 %v368
        %v759 = vpop.f32.mrb[0].mxu0
        %v760 = vadd.f32 0.0, %v759
        %v761 = vpop.f32.mrb[0].mxu0
        %v762 = vpop.f32.mrb[0].mxu0
        %v763 = vadd.f32 0.0, %v762
        %v764 = vpop.f32.mrb[0].mxu0
        %765 = vdwg.mxu0
        %v766 = vpack.c.bf16 %v763, %v760
        %v783 = vunpack.c.l.b16 %v707
        %v784 = vunpack.c.l.b16 %v708
        %v785 = vunpack.c.l.b16 %v709
        %v786 = vunpack.c.l.b16 %v710
        %v787 = vunpack.c.l.b16 %v711
        %v788 = vunpack.c.l.b16 %v712
        %v789 = vunpack.c.l.b16 %v713
        %v790 = vunpack.c.l.b16 %v714
        %v791 = vunpack.c.l.b16 %v715
        %v792 = vunpack.c.l.b16 %v716
        %v793 = vunpack.c.l.b16 %v717
        %v794 = vunpack.c.l.b16 %v718
        %v795 = vunpack.c.l.b16 %v719
        %v796 = vunpack.c.l.b16 %v720
        %v797 = vunpack.c.l.b16 %v721
        %v798 = vunpack.c.l.b16 %v722
        %v799 = vpack.c.b16 %v784, %v783
        %v800 = vpack.c.b16 %v786, %v785
        %v801 = vpack.c.b16 %v788, %v787
        %v802 = vpack.c.b16 %v790, %v789
        %v803 = vpack.c.b16 %v792, %v791
        %v804 = vpack.c.b16 %v794, %v793
        %v805 = vpack.c.b16 %v796, %v795
        %v806 = vpack.c.b16 %v798, %v797
        %815 = vmatprep.subr.bf16.mxu0 0
        %816 = vmatpush1.bf16.msra.mxu0 %v799
        %817 = vmatprep.subr.bf16.mxu0 0
        %818 = vmatpush1.bf16.msra.mxu0 %v800
        %819 = vmatprep.subr.bf16.mxu0 0
        %820 = vmatpush1.bf16.msra.mxu0 %v801
        %821 = vmatprep.subr.bf16.mxu0 0
        %822 = vmatpush1.bf16.msra.mxu0 %v802
        %823 = vmatprep.subr.bf16.mxu0 0
        %824 = vmatpush1.bf16.msra.mxu0 %v803
        %825 = vmatprep.subr.bf16.mxu0 0
        %826 = vmatpush1.bf16.msra.mxu0 %v804
        %827 = vmatprep.subr.bf16.mxu0 0
        %828 = vmatpush1.bf16.msra.mxu0 %v805
        %829 = vmatprep.subr.bf16.mxu0 0
        %830 = vmatpush1.bf16.msra.mxu0 %v806
        %831 = vmatprep.subr.bf16.mxu0 0
        %832 = vmatpush1.bf16.msra.mxu0 0
        %833 = vmatprep.subr.bf16.mxu0 0
        %834 = vmatpush1.bf16.msra.mxu0 0
        %835 = vmatprep.subr.bf16.mxu0 0
        %836 = vmatpush1.bf16.msra.mxu0 0
        %837 = vmatprep.subr.bf16.mxu0 0
        %838 = vmatpush1.bf16.msra.mxu0 0
        %839 = vmatprep.subr.bf16.mxu0 0
        %840 = vmatpush1.bf16.msra.mxu0 0
        %841 = vmatprep.subr.bf16.mxu0 0
        %842 = vmatpush1.bf16.msra.mxu0 0
        %843 = vmatprep.subr.bf16.mxu0 0
        %844 = vmatpush1.bf16.msra.mxu0 0
        %845 = vmatprep.subr.bf16.mxu0 0
        %846 = vmatpush1.bf16.msra.mxu0 0
        %847 = vmatprep.mubr.bf16.mxu0 0
        %848 = vmatmul.mubr.bf16.gmra.mrb[0].mxu0 %v688
        %v849 = vpop.f32.mrb[0].mxu0
        %v850 = vadd.f32 0.0, %v849
        %v851 = vpop.f32.mrb[0].mxu0
        %v852 = vpop.f32.mrb[0].mxu0
        %v853 = vadd.f32 0.0, %v852
        %v854 = vpop.f32.mrb[0].mxu0
        %855 = vdwg.mxu0
        %v872 = vunpack.c.l.b16 %v690
        %v873 = vunpack.c.l.b16 %v691
        %v874 = vunpack.c.l.b16 %v692
        %v875 = vunpack.c.l.b16 %v693
        %v876 = vunpack.c.l.b16 %v694
        %v877 = vunpack.c.l.b16 %v695
        %v878 = vunpack.c.l.b16 %v696
        %v879 = vunpack.c.l.b16 %v697
        %v880 = vunpack.c.l.b16 %v698
        %v881 = vunpack.c.l.b16 %v699
        %v882 = vunpack.c.l.b16 %v700
        %v883 = vunpack.c.l.b16 %v701
        %v884 = vunpack.c.l.b16 %v702
        %v885 = vunpack.c.l.b16 %v703
        %v886 = vunpack.c.l.b16 %v704
        %v887 = vunpack.c.l.b16 %v705
        %v888 = vpack.c.b16 %v873, %v872
        %v889 = vpack.c.b16 %v875, %v874
        %v890 = vpack.c.b16 %v877, %v876
        %v891 = vpack.c.b16 %v879, %v878
        %v892 = vpack.c.b16 %v881, %v880
        %v893 = vpack.c.b16 %v883, %v882
        %v894 = vpack.c.b16 %v885, %v884
        %v895 = vpack.c.b16 %v887, %v886
        %904 = vmatprep.subr.bf16.mxu0 0
        %905 = vmatpush1.bf16.msra.mxu0 %v888
        %906 = vmatprep.subr.bf16.mxu0 0
        %907 = vmatpush1.bf16.msra.mxu0 %v889
        %908 = vmatprep.subr.bf16.mxu0 0
        %909 = vmatpush1.bf16.msra.mxu0 %v890
        %910 = vmatprep.subr.bf16.mxu0 0
        %911 = vmatpush1.bf16.msra.mxu0 %v891
        %912 = vmatprep.subr.bf16.mxu0 0
        %913 = vmatpush1.bf16.msra.mxu0 %v892
        %914 = vmatprep.subr.bf16.mxu0 0
        %915 = vmatpush1.bf16.msra.mxu0 %v893
        %916 = vmatprep.subr.bf16.mxu0 0
        %917 = vmatpush1.bf16.msra.mxu0 %v894
        %918 = vmatprep.subr.bf16.mxu0 0
        %919 = vmatpush1.bf16.msra.mxu0 %v895
        %920 = vmatprep.subr.bf16.mxu0 0
        %921 = vmatpush1.bf16.msra.mxu0 0
        %922 = vmatprep.subr.bf16.mxu0 0
        %923 = vmatpush1.bf16.msra.mxu0 0
        %924 = vmatprep.subr.bf16.mxu0 0
        %925 = vmatpush1.bf16.msra.mxu0 0
        %926 = vmatprep.subr.bf16.mxu0 0
        %927 = vmatpush1.bf16.msra.mxu0 0
        %928 = vmatprep.subr.bf16.mxu0 0
        %929 = vmatpush1.bf16.msra.mxu0 0
        %930 = vmatprep.subr.bf16.mxu0 0
        %931 = vmatpush1.bf16.msra.mxu0 0
        %932 = vmatprep.subr.bf16.mxu0 0
        %933 = vmatpush1.bf16.msra.mxu0 0
        %934 = vmatprep.subr.bf16.mxu0 0
        %935 = vmatpush1.bf16.msra.mxu0 0
        %936 = vmatprep.mubr.bf16.mxu0 0
        %937 = vmatmul.mubr.bf16.gmra.mrb[0].mxu0 %v766
        %v938 = vpop.f32.mrb[0].mxu0
        %v939 = vadd.f32 %v850, %v938
        %v940 = vpop.f32.mrb[0].mxu0
        %v941 = vpop.f32.mrb[0].mxu0
        %v942 = vadd.f32 %v853, %v941
        %v943 = vpop.f32.mrb[0].mxu0
        %944 = vdwg.mxu0
        %v946 = vlaneseq
        %v947 = vshrl.u32 %v946, 7
        %v948 = vsub.s32 0, %v947
        %v949 = vrot.slane %v724, %v948
        %v951 = vadd.f32 %v939, %v949
        %v952 = vadd.f32 %v942, %v949
        %v953 = vtanh.pop %v951
        %v954 = vtanh.pop %v952
        %955 = vst [vmem:[%s247] sm:$0xff] %v953
        %956 = vst [vmem:[%s247 + $0x8] sm:$0xff] %v954
        %s957 = sand.u32 %s143, 1
        %s958 = scalar_lea.sflag [#allocation4], %s957
        %s959 = sand.u32 %s143, 1
        %s960 = smul.addr %s959, 16
        %s961 = scalar_lea.vmem [#allocation5], %s960
        // Predicated region
        $region45: #{tpu_custom_call.1} parent=39 // pred_check
          %p962 = pneg %p153
        $region46: #{tpu_custom_call.1} parent=39 // pred_check_branch
          %964 = sbr.rel (%p962) target = $region48
        $region47: #{tpu_custom_call.1} parent=39 // pred_region
          %s966 = ssub.s32 256, 256
          %967 = vsyncadd %s958, %s966
          %s968 = smul.addr %s20, 2
          %s969 = smul.addr %s968, 128
          %s970 = scalar_lea.hbm %s5, %s969
          %s971 = sshll.u32 %s961, 4
          %s972 = int_to_ptr.vmem [resolvable:$true] %s971
          %977 = dma.vmem_to_hbm [thread:$0]  %s972, 256, %s970, %s958, 128, 128, 8
        $region48: #{tpu_custom_call.1} parent=39 // pred_fallthru
          _
      $region40: #{tpu_custom_call.1} parent=5 // pred_fallthru
        _
      %p978 = scmp.le.s32.totalorder 2, %s15
      // Predicated region
      $region49: #{tpu_custom_call.1} parent=5 // pred_check
        %p979 = pneg %p978
      $region50: #{tpu_custom_call.1} parent=5 // pred_check_branch
        %981 = sbr.rel (%p979) target = $region52
      $region51: #{tpu_custom_call.1} parent=5 // pred_region
        %s982 = ssub.s32 %s15, 2
        // Predicated region
        $region53: #{tpu_custom_call.1} parent=51 // pred_check
          %p983 = pneg %p159
        $region54: #{tpu_custom_call.1} parent=51 // pred_check_branch
          %985 = sbr.rel (%p983) target = $region56
        $region55: #{tpu_custom_call.1} parent=51 // pred_region
          %s986 = sand.u32 %s144, 1
          %s987 = scalar_lea.sflag [#allocation4], %s986
          %s988 = sand.u32 %s144, 1
          %s989 = smul.addr %s988, 16
          %s990 = scalar_lea.vmem [#allocation5], %s989
          %991 = dma.done %s987, 256
        $region56: #{tpu_custom_call.1} parent=51 // pred_fallthru
          _
      $region52: #{tpu_custom_call.1} parent=5 // pred_fallthru
        _
    $region6: #{tpu_custom_call.1} parent=1 // loop_footer
      %s19 = sadd.s32 1, %s15
    $region7: #{tpu_custom_call.1} parent=1 // loop_footer_branch
      %14 = sbr.rel target = $region3
    $region8: #{tpu_custom_call.1} parent=1 // loop_exit
      _
    %992 = vsyncpa [#allocation3], 1
    %s993 = scalar_lea.sflag [#allocation3], 1
    %994 = vsyncpa %s993, 1
    %995 = vsyncpa [#allocation4], 1
    %s996 = scalar_lea.sflag [#allocation4], 1
    %997 = vsyncpa %s996, 1

</llo_original>
